<compile_context>
chip_gen: v6e
topology: v6e:2x2x1
jax: 0.10.0
libtpu: 0.0.40
codegen_flags: <defaults>
</compile_context>

<pallas_src>
import functools

import jax
import jax.numpy as jnp
from jax.experimental import pallas as pl
from jax.experimental.pallas import tpu as pltpu


# ----------------------------- Pallas kernel ------------------------------- #
def mmvae_kernel(
    x_ref, eps_ref,
    w_ee_ref, b_ee_ref,       # expert encoder       (Linear + ReLU)
    w_se_ref, b_se_ref,       # shared encoder       (Linear + ReLU)
    w_head_ref, b_head_ref,   # fused [0s | mu | logvar | adv logits] heads
    w_sd_ref, b_sd_ref,       # shared decoder       (Linear + ReLU)
    w_ed_ref, b_ed_ref,       # expert decoder       (Linear + Sigmoid)
    w_xd_ref, b_xd_ref,       # expert discriminator (Linear + Sigmoid, N=1)
    slab_ref,
    *, d_in, d_z, n_classes,
):
    f32 = jnp.float32
    bf16 = jnp.bfloat16

    pad_h = slab_ref.shape[-1]
    # Slab lane layout: [ xr (d_in) | mu (d_z) | logvar (d_z) | adv (C) | fb | 0s ]
    mu_off = d_in
    lv_off = d_in + d_z
    fb_off = d_in + 2 * d_z + n_classes

    x = x_ref[...]

    # Expert-specific encoder: Linear + ReLU (bf16 MXU operands, f32 accumulate).
    h = jnp.dot(x.astype(bf16), w_ee_ref[...], preferred_element_type=f32)
    h = jnp.maximum(h + b_ee_ref[...], 0.0)

    # Shared encoder: Linear + ReLU.
    h = jnp.dot(h.astype(bf16), w_se_ref[...], preferred_element_type=f32)
    h = jnp.maximum(h + b_se_ref[...], 0.0)

    # Fused heads: one lane-dense MXU pass.  Weight columns outside
    # [mu_off, fb_off) are zero, so lanes [0, d_in) of `head` are exactly 0
    # (reserved for xr) and lanes >= fb_off are 0 (spare for fb).
    head = jnp.dot(h.astype(bf16), w_head_ref[...], preferred_element_type=f32)
    head = head + b_head_ref[...]

    mu = head[:, mu_off:mu_off + d_z]
    lv = head[:, lv_off:lv_off + d_z]

    # reparameterize(mu, exp(0.5*logvar)): z = mu + exp(0.5*lv) * eps (f32 VPU/EUP).
    z = mu + jnp.exp(0.5 * lv) * eps_ref[...]

    # Shared decoder: Linear + ReLU.
    d = jnp.dot(z.astype(bf16), w_sd_ref[...], preferred_element_type=f32)
    d = jnp.maximum(d + b_sd_ref[...], 0.0)

    # Expert-specific decoder: Linear + Sigmoid (generated output xr).
    xr = jnp.dot(d.astype(bf16), w_ed_ref[...], preferred_element_type=f32)
    xr = jax.nn.sigmoid(xr + b_ed_ref[...])

    # Expert discriminator (out_features == 1): VPU multiply + cross-lane
    # reduction instead of a 1-lane MXU matmul; scalar bias read from SMEM.
    fb = jnp.sum(xr * w_xd_ref[...], axis=-1, keepdims=True) + b_xd_ref[0]
    fb = jax.nn.sigmoid(fb)

    # Pack xr into the (zero) leading d_in lanes of the head slab and fb into
    # its spare lane so ALL outputs leave via one unmasked 128-lane store.
    xr_pad = jnp.concatenate(
        [xr, jnp.zeros((xr.shape[0], pad_h - d_in), f32)], axis=-1)
    col = jax.lax.broadcasted_iota(jnp.int32, head.shape, 1)
    slab_ref[...] = jnp.where(col == fb_off, fb, head + xr_pad)


# --------------------- One-time parameter packing --------------------------- #
def pack_params(params):
    """Hoisted out of the hot path: fuse the tiny heads into one lane-dense
    zero-padded weight and pre-cast MXU operands to bf16."""
    d_in, d_s = params["w_ee"].shape
    d_h = params["w_se"].shape[1]
    d_z = params["w_mu"].shape[1]
    c = params["w_mc"].shape[1]

    n_slab = d_in + 2 * d_z + c + 1                 # xr | mu | lv | adv | fb
    pad_h = ((n_slab + 127) // 128) * 128

    w_head = jnp.zeros((d_h, pad_h), jnp.float32)
    w_head = w_head.at[:, d_in:d_in + d_z].set(params["w_mu"])
    w_head = w_head.at[:, d_in + d_z:d_in + 2 * d_z].set(params["w_lv"])
    w_head = w_head.at[:, d_in + 2 * d_z:d_in + 2 * d_z + c].set(params["w_mc"])
    b_head = jnp.zeros((1, pad_h), jnp.float32)
    b_head = b_head.at[:, d_in:d_in + d_z].set(params["b_mu"])
    b_head = b_head.at[:, d_in + d_z:d_in + 2 * d_z].set(params["b_lv"])
    b_head = b_head.at[:, d_in + 2 * d_z:d_in + 2 * d_z + c].set(params["b_mc"])

    bf = lambda w: w.astype(jnp.bfloat16)           # MXU operands in bf16
    return {
        "meta": dict(d_in=d_in, d_s=d_s, d_h=d_h, d_z=d_z, c=c, pad_h=pad_h),
        "w_ee": bf(params["w_ee"]), "b_ee": params["b_ee"],
        "w_se": bf(params["w_se"]), "b_se": params["b_se"],
        "w_head": bf(w_head), "b_head": b_head,
        "w_sd": bf(params["w_sd"]), "b_sd": params["b_sd"],
        "w_ed": bf(params["w_ed"]), "b_ed": params["b_ed"],
        "w_xd": params["w_xd"].reshape(1, d_in),    # f32 row, used on the VPU
        "b_xd": params["b_xd"].reshape(1),          # f32 scalar -> SMEM
    }


# ------------------------------- Wrapper ------------------------------------ #
def mmvae_forward(x, eps, packed, *, block_b=None, min_grid=1):
    meta = packed["meta"]
    d_in, d_s, d_h, d_z, c, pad_h = (
        meta["d_in"], meta["d_s"], meta["d_h"],
        meta["d_z"], meta["c"], meta["pad_h"])
    B = x.shape[0]
    assert x.shape == (B, d_in) and eps.shape == (B, d_z)

    # ---- batch tiling: as large as possible; min_grid=2 keeps two grid steps
    # so the "parallel" axis shards across both TensorCores on v7x. ------------
    if block_b is None:
        block_b = pl.cdiv(B, max(1, min_grid))
    TB = min(block_b, B)
    TB = max(8, ((TB + 7) // 8) * 8)                # sublane-aligned tile
    B_pad = pl.cdiv(B, TB) * TB
    if B_pad != B:
        x = jnp.pad(x, ((0, B_pad - B), (0, 0)))
        eps = jnp.pad(eps, ((0, B_pad - B), (0, 0)))
    grid = (B_pad // TB,)

    tile_spec = lambda d: pl.BlockSpec((TB, d), lambda i: (i, 0))
    resident = lambda shape: pl.BlockSpec(shape, lambda i: (0, 0))

    in_specs = [
        tile_spec(d_in),                                    # x
        tile_spec(d_z),                                     # eps
        resident((d_in, d_s)), resident((1, d_s)),          # expert encoder
        resident((d_s, d_h)), resident((1, d_h)),           # shared encoder
        resident((d_h, pad_h)), resident((1, pad_h)),       # fused heads
        resident((d_z, d_s)), resident((1, d_s)),           # shared decoder
        resident((d_s, d_in)), resident((1, d_in)),         # expert decoder
        resident((1, d_in)),                                # expert disc weight (VPU)
        pl.BlockSpec(memory_space=pltpu.MemorySpace.SMEM),  # expert disc bias (scalar)
    ]
    out_specs = tile_spec(pad_h)
    out_shape = jax.ShapeDtypeStruct((B_pad, pad_h), jnp.float32)

    # ---- cost estimate & VMEM budget ----------------------------------------
    flops = 2 * B_pad * (d_in * d_s + d_s * d_h + d_h * pad_h
                         + d_z * d_s + d_s * d_in + d_in * 1)
    transcendentals = B_pad * (d_z + d_in + 1)              # exp + 2x sigmoid
    weight_bytes = (2 * (d_in * d_s + d_s * d_h + d_h * pad_h
                         + d_z * d_s + d_s * d_in)          # bf16 weights
                    + 4 * (d_s + d_h + pad_h + d_s + d_in + d_in + 1))
    io_bytes = 4 * B_pad * (d_in + d_z + pad_h)
    cost = pl.CostEstimate(flops=flops, transcendentals=transcendentals,
                           bytes_accessed=weight_bytes + io_bytes)

    # Resident weights (possibly double-buffered) + double-buffered data tiles
    # + activation headroom.  Always set the scoped limit explicitly (v5e's
    # default is only 16 MiB), floor at the 32 MiB default, cap at 56 MiB to
    # leave compiler headroom on v7x's 64 MiB physical VMEM.
    vmem_need = (2 * weight_bytes
                 + 2 * 4 * TB * (d_in + d_z + pad_h)
                 + 4 * 4 * TB * pad_h)
    vmem_limit = int(min(max(2 * vmem_need, 32 * 1024 * 1024),
                         56 * 1024 * 1024))

    kernel = functools.partial(mmvae_kernel, d_in=d_in, d_z=d_z, n_classes=c)
    slab = pl.pallas_call(
        kernel,
        grid=grid,
        in_specs=in_specs,
        out_specs=out_specs,
        out_shape=out_shape,
        compiler_params=pltpu.CompilerParams(
            dimension_semantics=("parallel",),
            vmem_limit_bytes=vmem_limit),
        cost_estimate=cost,
    )(
        x, eps,
        packed["w_ee"], packed["b_ee"],
        packed["w_se"], packed["b_se"],
        packed["w_head"], packed["b_head"],
        packed["w_sd"], packed["b_sd"],
        packed["w_ed"], packed["b_ed"],
        packed["w_xd"], packed["b_xd"],
    )

    slab = slab[:B]
    xr = slab[:, :d_in]
    mu = slab[:, d_in:d_in + d_z]
    var = slab[:, d_in + d_z:d_in + 2 * d_z]            # raw logvar (pre-exp)
    adv = slab[:, d_in + 2 * d_z:d_in + 2 * d_z + c]
    exp_fb = slab[:, d_in + 2 * d_z + c:d_in + 2 * d_z + c + 1]
    return xr, mu, var, adv, exp_fb


# --------------------------- Parameter init --------------------------------- #
def init_params(key, d_in, d_s, d_h, d_z, n_classes):
    def linear(k, fan_in, fan_out):
        kw, kb = jax.random.split(k)
        scale = 1.0 / jnp.sqrt(fan_in)
        w = jax.random.uniform(kw, (fan_in, fan_out), jnp.float32, -scale, scale)
        b = jax.random.uniform(kb, (1, fan_out), jnp.float32, -scale, scale)
        return w, b

    keys = jax.random.split(key, 8)
    p = {}
    p["w_ee"], p["b_ee"] = linear(keys[0], d_in, d_s)       # expert encoder
    p["w_se"], p["b_se"] = linear(keys[1], d_s, d_h)        # shared encoder
    p["w_mc"], p["b_mc"] = linear(keys[2], d_h, n_classes)  # multi-class disc
    p["w_mu"], p["b_mu"] = linear(keys[3], d_h, d_z)        # mean
    p["w_lv"], p["b_lv"] = linear(keys[4], d_h, d_z)        # var (logvar)
    p["w_sd"], p["b_sd"] = linear(keys[5], d_z, d_s)        # shared decoder
    p["w_ed"], p["b_ed"] = linear(keys[6], d_s, d_in)       # expert decoder
    p["w_xd"], p["b_xd"] = linear(keys[7], d_in, 1)         # expert disc
    return p


# --------------------------- Pure-JAX reference ------------------------------ #
def mmvae_reference(x, eps, p):
    # Mirrors the kernel numerics: bf16 MXU operands, f32 accumulate,
    # f32 elementwise math.
    bf16, f32 = jnp.bfloat16, jnp.float32
    dot = lambda a, w: jnp.dot(a.astype(bf16), w.astype(bf16),
                               preferred_element_type=f32)
    relu = lambda v: jnp.maximum(v, 0.0)
    h = relu(dot(x, p["w_ee"]) + p["b_ee"])
    h = relu(dot(h, p["w_se"]) + p["b_se"])
    adv = dot(h, p["w_mc"]) + p["b_mc"]
    mu = dot(h, p["w_mu"]) + p["b_mu"]
    lv = dot(h, p["w_lv"]) + p["b_lv"]
    z = mu + jnp.exp(0.5 * lv) * eps
    d = relu(dot(z, p["w_sd"]) + p["b_sd"])
    xr = jax.nn.sigmoid(dot(d, p["w_ed"]) + p["b_ed"])
    fb = jax.nn.sigmoid(xr @ p["w_xd"] + p["b_xd"])
    return xr, mu, lv, adv, fb


# --------------------------------- Main -------------------------------------- #
if __name__ == "__main__":
    B, D_in, D_s, D_h, D_z, C = 256, 32, 32, 32, 16, 2

    key = jax.random.PRNGKey(0)
    k_x, k_eps, k_p = jax.random.split(key, 3)

    x = jax.random.normal(k_x, (B, D_in), jnp.float32)
    eps = jax.random.normal(k_eps, (B, D_z), jnp.float32)  # torch.randn_like(var)
    params = init_params(k_p, D_in, D_s, D_h, D_z, C)

    packed = pack_params(params)          # one-time head fusion + bf16 casts

    # min_grid=1 -> grid=(1,) (optimal on single-TC v5e/v6e);
    # pass min_grid=2 on v7x so the parallel batch axis uses both TensorCores.
    outs = mmvae_forward(x, eps, packed, min_grid=1)
    outs = jax.block_until_ready(outs)

    refs = mmvae_reference(x, eps, params)
    # bf16 matmul operands -> tolerance loosened vs a pure-f32 check.
    for o, r in zip(outs, refs):
        assert o.shape == r.shape and o.dtype == r.dtype
        assert jnp.allclose(o, r, atol=2e-2, rtol=2e-2), "mismatch vs reference"

    print("KERNEL_OK")
</pallas_src>

<mosaic_0001>
module attributes {stable_mosaic.version = 11 : i64} {
  func.func @mmvae_kernel(%arg0: i32, %arg1: memref<256x32xf32, #tpu.memory_space<vmem>>, %arg2: memref<256x16xf32, #tpu.memory_space<vmem>>, %arg3: memref<32x32xbf16, #tpu.memory_space<vmem>>, %arg4: memref<1x32xf32, #tpu.memory_space<vmem>>, %arg5: memref<32x32xbf16, #tpu.memory_space<vmem>>, %arg6: memref<1x32xf32, #tpu.memory_space<vmem>>, %arg7: memref<32x128xbf16, #tpu.memory_space<vmem>>, %arg8: memref<1x128xf32, #tpu.memory_space<vmem>>, %arg9: memref<16x32xbf16, #tpu.memory_space<vmem>>, %arg10: memref<1x32xf32, #tpu.memory_space<vmem>>, %arg11: memref<32x32xbf16, #tpu.memory_space<vmem>>, %arg12: memref<1x32xf32, #tpu.memory_space<vmem>>, %arg13: memref<1x32xf32, #tpu.memory_space<vmem>>, %arg14: memref<1xf32, #tpu.memory_space<smem>>, %arg15: memref<256x128xf32, #tpu.memory_space<vmem>>) attributes {dimension_semantics = [#tpu.dimension_semantics<parallel>], iteration_bounds = array<i64: 1>, scalar_prefetch = 0 : i64, scratch_operands = 0 : i64, tpu.core_type = #tpu.core_type<tc>, window_params = [{transform_indices = @transform_0, window_bounds = array<i64: 256, 32>}, {transform_indices = @transform_1, window_bounds = array<i64: 256, 16>}, {pipeline_mode = #tpu.pipeline_mode<synchronous>, transform_indices = @transform_2, window_bounds = array<i64: 32, 32>}, {pipeline_mode = #tpu.pipeline_mode<synchronous>, transform_indices = @transform_3, window_bounds = array<i64: 1, 32>}, {pipeline_mode = #tpu.pipeline_mode<synchronous>, transform_indices = @transform_4, window_bounds = array<i64: 32, 32>}, {pipeline_mode = #tpu.pipeline_mode<synchronous>, transform_indices = @transform_5, window_bounds = array<i64: 1, 32>}, {pipeline_mode = #tpu.pipeline_mode<synchronous>, transform_indices = @transform_6, window_bounds = array<i64: 32, 128>}, {pipeline_mode = #tpu.pipeline_mode<synchronous>, transform_indices = @transform_7, window_bounds = array<i64: 1, 128>}, {pipeline_mode = #tpu.pipeline_mode<synchronous>, transform_indices = @transform_8, window_bounds = array<i64: 16, 32>}, {pipeline_mode = #tpu.pipeline_mode<synchronous>, transform_indices = @transform_9, window_bounds = array<i64: 1, 32>}, {pipeline_mode = #tpu.pipeline_mode<synchronous>, transform_indices = @transform_10, window_bounds = array<i64: 32, 32>}, {pipeline_mode = #tpu.pipeline_mode<synchronous>, transform_indices = @transform_11, window_bounds = array<i64: 1, 32>}, {pipeline_mode = #tpu.pipeline_mode<synchronous>, transform_indices = @transform_12, window_bounds = array<i64: 1, 32>}, {transform_indices = @transform_13, window_bounds = array<i64: 1>}, {transform_indices = @transform_14, window_bounds = array<i64: 256, 128>}]} {
    %c0 = arith.constant 0 : index
    %c0_0 = arith.constant 0 : index
    %0 = vector.load %arg1[%c0, %c0_0] : memref<256x32xf32, #tpu.memory_space<vmem>>, vector<256x32xf32>
    %1 = arith.truncf %0 : vector<256x32xf32> to vector<256x32xbf16>
    %c0_1 = arith.constant 0 : index
    %c0_2 = arith.constant 0 : index
    %2 = vector.load %arg3[%c0_1, %c0_2] : memref<32x32xbf16, #tpu.memory_space<vmem>>, vector<32x32xbf16>
    %cst = arith.constant dense<0.000000e+00> : vector<256x32xf32>
    %3 = tpu.matmul %1, %2, %cst {dimension_numbers = #tpu.dot_dimension_numbers<[1], [0], [0], [1], [0, 0, 1, 1], [], []>} : vector<256x32xbf16>, vector<32x32xbf16>, vector<256x32xf32> -> vector<256x32xf32>
    %c0_3 = arith.constant 0 : index
    %c0_4 = arith.constant 0 : index
    %4 = vector.load %arg4[%c0_3, %c0_4] : memref<1x32xf32, #tpu.memory_space<vmem>>, vector<1x32xf32>
    %5 = vector.broadcast %4 : vector<1x32xf32> to vector<256x32xf32>
    %6 = arith.addf %3, %5 : vector<256x32xf32>
    %cst_5 = arith.constant 0.000000e+00 : f32
    %7 = vector.broadcast %cst_5 : f32 to vector<256x32xf32>
    %8 = arith.maximumf %6, %7 : vector<256x32xf32>
    %9 = arith.truncf %8 : vector<256x32xf32> to vector<256x32xbf16>
    %c0_6 = arith.constant 0 : index
    %c0_7 = arith.constant 0 : index
    %10 = vector.load %arg5[%c0_6, %c0_7] : memref<32x32xbf16, #tpu.memory_space<vmem>>, vector<32x32xbf16>
    %cst_8 = arith.constant dense<0.000000e+00> : vector<256x32xf32>
    %11 = tpu.matmul %9, %10, %cst_8 {dimension_numbers = #tpu.dot_dimension_numbers<[1], [0], [0], [1], [0, 0, 1, 1], [], []>} : vector<256x32xbf16>, vector<32x32xbf16>, vector<256x32xf32> -> vector<256x32xf32>
    %c0_9 = arith.constant 0 : index
    %c0_10 = arith.constant 0 : index
    %12 = vector.load %arg6[%c0_9, %c0_10] : memref<1x32xf32, #tpu.memory_space<vmem>>, vector<1x32xf32>
    %13 = vector.broadcast %12 : vector<1x32xf32> to vector<256x32xf32>
    %14 = arith.addf %11, %13 : vector<256x32xf32>
    %cst_11 = arith.constant 0.000000e+00 : f32
    %15 = vector.broadcast %cst_11 : f32 to vector<256x32xf32>
    %16 = arith.maximumf %14, %15 : vector<256x32xf32>
    %17 = arith.truncf %16 : vector<256x32xf32> to vector<256x32xbf16>
    %c0_12 = arith.constant 0 : index
    %c0_13 = arith.constant 0 : index
    %18 = vector.load %arg7[%c0_12, %c0_13] : memref<32x128xbf16, #tpu.memory_space<vmem>>, vector<32x128xbf16>
    %cst_14 = arith.constant dense<0.000000e+00> : vector<256x128xf32>
    %19 = tpu.matmul %17, %18, %cst_14 {dimension_numbers = #tpu.dot_dimension_numbers<[1], [0], [0], [1], [0, 0, 1, 1], [], []>} : vector<256x32xbf16>, vector<32x128xbf16>, vector<256x128xf32> -> vector<256x128xf32>
    %c0_15 = arith.constant 0 : index
    %c0_16 = arith.constant 0 : index
    %20 = vector.load %arg8[%c0_15, %c0_16] : memref<1x128xf32, #tpu.memory_space<vmem>>, vector<1x128xf32>
    %21 = vector.broadcast %20 : vector<1x128xf32> to vector<256x128xf32>
    %22 = arith.addf %19, %21 : vector<256x128xf32>
    %23 = vector.extract_strided_slice %22 {offsets = [0, 32], sizes = [256, 16], strides = [1, 1]} : vector<256x128xf32> to vector<256x16xf32>
    %24 = vector.extract_strided_slice %22 {offsets = [0, 48], sizes = [256, 16], strides = [1, 1]} : vector<256x128xf32> to vector<256x16xf32>
    %cst_17 = arith.constant 5.000000e-01 : f32
    %25 = vector.broadcast %cst_17 : f32 to vector<256x16xf32>
    %26 = arith.mulf %25, %24 : vector<256x16xf32>
    %27 = math.exp %26 : vector<256x16xf32>
    %c0_18 = arith.constant 0 : index
    %c0_19 = arith.constant 0 : index
    %28 = vector.load %arg2[%c0_18, %c0_19] : memref<256x16xf32, #tpu.memory_space<vmem>>, vector<256x16xf32>
    %29 = arith.mulf %27, %28 : vector<256x16xf32>
    %30 = arith.addf %23, %29 : vector<256x16xf32>
    %31 = arith.truncf %30 : vector<256x16xf32> to vector<256x16xbf16>
    %c0_20 = arith.constant 0 : index
    %c0_21 = arith.constant 0 : index
    %32 = vector.load %arg9[%c0_20, %c0_21] : memref<16x32xbf16, #tpu.memory_space<vmem>>, vector<16x32xbf16>
    %cst_22 = arith.constant dense<0.000000e+00> : vector<256x32xf32>
    %33 = tpu.matmul %31, %32, %cst_22 {dimension_numbers = #tpu.dot_dimension_numbers<[1], [0], [0], [1], [0, 0, 1, 1], [], []>} : vector<256x16xbf16>, vector<16x32xbf16>, vector<256x32xf32> -> vector<256x32xf32>
    %c0_23 = arith.constant 0 : index
    %c0_24 = arith.constant 0 : index
    %34 = vector.load %arg10[%c0_23, %c0_24] : memref<1x32xf32, #tpu.memory_space<vmem>>, vector<1x32xf32>
    %35 = vector.broadcast %34 : vector<1x32xf32> to vector<256x32xf32>
    %36 = arith.addf %33, %35 : vector<256x32xf32>
    %cst_25 = arith.constant 0.000000e+00 : f32
    %37 = vector.broadcast %cst_25 : f32 to vector<256x32xf32>
    %38 = arith.maximumf %36, %37 : vector<256x32xf32>
    %39 = arith.truncf %38 : vector<256x32xf32> to vector<256x32xbf16>
    %c0_26 = arith.constant 0 : index
    %c0_27 = arith.constant 0 : index
    %40 = vector.load %arg11[%c0_26, %c0_27] : memref<32x32xbf16, #tpu.memory_space<vmem>>, vector<32x32xbf16>
    %cst_28 = arith.constant dense<0.000000e+00> : vector<256x32xf32>
    %41 = tpu.matmul %39, %40, %cst_28 {dimension_numbers = #tpu.dot_dimension_numbers<[1], [0], [0], [1], [0, 0, 1, 1], [], []>} : vector<256x32xbf16>, vector<32x32xbf16>, vector<256x32xf32> -> vector<256x32xf32>
    %c0_29 = arith.constant 0 : index
    %c0_30 = arith.constant 0 : index
    %42 = vector.load %arg12[%c0_29, %c0_30] : memref<1x32xf32, #tpu.memory_space<vmem>>, vector<1x32xf32>
    %43 = vector.broadcast %42 : vector<1x32xf32> to vector<256x32xf32>
    %44 = arith.addf %41, %43 : vector<256x32xf32>
    %45 = arith.negf %44 : vector<256x32xf32>
    %46 = math.exp %45 : vector<256x32xf32>
    %cst_31 = arith.constant 1.000000e+00 : f32
    %47 = vector.broadcast %cst_31 : f32 to vector<256x32xf32>
    %48 = arith.addf %47, %46 : vector<256x32xf32>
    %49 = arith.divf %47, %48 : vector<256x32xf32>
    %c0_32 = arith.constant 0 : index
    %c0_33 = arith.constant 0 : index
    %50 = vector.load %arg13[%c0_32, %c0_33] : memref<1x32xf32, #tpu.memory_space<vmem>>, vector<1x32xf32>
    %51 = vector.broadcast %50 : vector<1x32xf32> to vector<256x32xf32>
    %52 = arith.mulf %49, %51 : vector<256x32xf32>
    %cst_34 = arith.constant dense<0.000000e+00> : vector<256xf32>
    %53 = vector.multi_reduction <add>, %52, %cst_34 [1] : vector<256x32xf32> to vector<256xf32>
    %54 = vector.shape_cast %53 : vector<256xf32> to vector<256x1xf32>
    %c0_35 = arith.constant 0 : index
    %55 = memref.load %arg14[%c0_35] : memref<1xf32, #tpu.memory_space<smem>>
    %56 = vector.broadcast %55 : f32 to vector<256x1xf32>
    %57 = arith.addf %54, %56 : vector<256x1xf32>
    %58 = arith.negf %57 : vector<256x1xf32>
    %59 = math.exp %58 : vector<256x1xf32>
    %cst_36 = arith.constant 1.000000e+00 : f32
    %60 = vector.broadcast %cst_36 : f32 to vector<256x1xf32>
    %61 = arith.addf %60, %59 : vector<256x1xf32>
    %62 = arith.divf %60, %61 : vector<256x1xf32>
    %cst_37 = arith.constant 0.000000e+00 : f32
    %63 = vector.broadcast %cst_37 : f32 to vector<256x96xf32>
    %64 = tpu.concatenate %49, %63 in 1 : vector<256x32xf32>, vector<256x96xf32> -> vector<256x128xf32>
    %65 = tpu.iota {dimensions = array<i32: 1>} : vector<256x128xi32>
    %c66_i32 = arith.constant 66 : i32
    %66 = vector.broadcast %c66_i32 : i32 to vector<256x128xi32>
    %67 = arith.cmpi eq, %65, %66 : vector<256x128xi32>
    %68 = arith.addf %22, %64 : vector<256x128xf32>
    %69 = vector.shape_cast %62 : vector<256x1xf32> to vector<256x1xf32>
    %70 = vector.broadcast %69 : vector<256x1xf32> to vector<256x128xf32>
    %71 = arith.select %67, %70, %68 : vector<256x128xi1>, vector<256x128xf32>
    %c0_38 = arith.constant 0 : index
    %c0_39 = arith.constant 0 : index
    %72 = vector.load %arg15[%c0_38, %c0_39] : memref<256x128xf32, #tpu.memory_space<vmem>>, vector<256x128xf32>
    tpu.vector_store %arg15[%c0_38, %c0_39], %71 {strides = array<i32>} : memref<256x128xf32, #tpu.memory_space<vmem>>, vector<256x128xf32>,
    return
  }
  func.func @transform_0(%arg0: i32) -> (i32, i32) {
    %c0_i32 = arith.constant 0 : i32
    %c0_i32_0 = arith.constant 0 : i32
    return %arg0, %c0_i32 : i32, i32
  }
  func.func @transform_1(%arg0: i32) -> (i32, i32) {
    %c0_i32 = arith.constant 0 : i32
    %c0_i32_0 = arith.constant 0 : i32
    return %arg0, %c0_i32 : i32, i32
  }
  func.func @transform_2(%arg0: i32) -> (i32, i32) {
    %c0_i32 = arith.constant 0 : i32
    %c0_i32_0 = arith.constant 0 : i32
    %c0_i32_1 = arith.constant 0 : i32
    return %c0_i32, %c0_i32_0 : i32, i32
  }
  func.func @transform_3(%arg0: i32) -> (i32, i32) {
    %c0_i32 = arith.constant 0 : i32
    %c0_i32_0 = arith.constant 0 : i32
    %c0_i32_1 = arith.constant 0 : i32
    return %c0_i32, %c0_i32_0 : i32, i32
  }
  func.func @transform_4(%arg0: i32) -> (i32, i32) {
    %c0_i32 = arith.constant 0 : i32
    %c0_i32_0 = arith.constant 0 : i32
    %c0_i32_1 = arith.constant 0 : i32
    return %c0_i32, %c0_i32_0 : i32, i32
  }
  func.func @transform_5(%arg0: i32) -> (i32, i32) {
    %c0_i32 = arith.constant 0 : i32
    %c0_i32_0 = arith.constant 0 : i32
    %c0_i32_1 = arith.constant 0 : i32
    return %c0_i32, %c0_i32_0 : i32, i32
  }
  func.func @transform_6(%arg0: i32) -> (i32, i32) {
    %c0_i32 = arith.constant 0 : i32
    %c0_i32_0 = arith.constant 0 : i32
    %c0_i32_1 = arith.constant 0 : i32
    return %c0_i32, %c0_i32_0 : i32, i32
  }
  func.func @transform_7(%arg0: i32) -> (i32, i32) {
    %c0_i32 = arith.constant 0 : i32
    %c0_i32_0 = arith.constant 0 : i32
    %c0_i32_1 = arith.constant 0 : i32
    return %c0_i32, %c0_i32_0 : i32, i32
  }
  func.func @transform_8(%arg0: i32) -> (i32, i32) {
    %c0_i32 = arith.constant 0 : i32
    %c0_i32_0 = arith.constant 0 : i32
    %c0_i32_1 = arith.constant 0 : i32
    return %c0_i32, %c0_i32_0 : i32, i32
  }
  func.func @transform_9(%arg0: i32) -> (i32, i32) {
    %c0_i32 = arith.constant 0 : i32
    %c0_i32_0 = arith.constant 0 : i32
    %c0_i32_1 = arith.constant 0 : i32
    return %c0_i32, %c0_i32_0 : i32, i32
  }
  func.func @transform_10(%arg0: i32) -> (i32, i32) {
    %c0_i32 = arith.constant 0 : i32
    %c0_i32_0 = arith.constant 0 : i32
    %c0_i32_1 = arith.constant 0 : i32
    return %c0_i32, %c0_i32_0 : i32, i32
  }
  func.func @transform_11(%arg0: i32) -> (i32, i32) {
    %c0_i32 = arith.constant 0 : i32
    %c0_i32_0 = arith.constant 0 : i32
    %c0_i32_1 = arith.constant 0 : i32
    return %c0_i32, %c0_i32_0 : i32, i32
  }
  func.func @transform_12(%arg0: i32) -> (i32, i32) {
    %c0_i32 = arith.constant 0 : i32
    %c0_i32_0 = arith.constant 0 : i32
    %c0_i32_1 = arith.constant 0 : i32
    return %c0_i32, %c0_i32_0 : i32, i32
  }
  func.func @transform_13(%arg0: i32) -> i32 {
    %c0_i32 = arith.constant 0 : i32
    %c0_i32_0 = arith.constant 0 : i32
    return %c0_i32 : i32
  }
  func.func @transform_14(%arg0: i32) -> (i32, i32) {
    %c0_i32 = arith.constant 0 : i32
    %c0_i32_0 = arith.constant 0 : i32
    return %arg0, %c0_i32 : i32, i32
  }
}

</mosaic_0001>

<llo_original>
// kernel: tpu_custom_call.1
$region0: #{tpu_custom_call.1}
  #allocation0 [shape = 'u32[]', space=smem, size = 0x4, offset = 0x4, fixed_abs, tag = 'smem constant byte address 0x4 - core index']
  #allocation1 [shape = 'u32[144,128]{1,0:T(1,128)}', space=vmem, size = 0x12000, scoped, tag = 'internal scratch']
  #allocation2 [shape = 'f32[1]{0:T(128)S(6)}', space=smem, size = 0x200, scoped, tag = 'scoped memory for tpu_custom_call.1']
  %s0 = inlined_call_operand.vmem [shape: f32[256,32], index: 0, kind: input, shape index: {}]
  %s1 = inlined_call_operand.vmem [shape: f32[256,16], index: 1, kind: input, shape index: {}]
  %s2 = inlined_call_operand.vmem [shape: bf16[32,32], index: 2, kind: input, shape index: {}]
  %s3 = inlined_call_operand.vmem [shape: f32[1,32], index: 3, kind: input, shape index: {}]
  %s4 = inlined_call_operand.vmem [shape: bf16[32,32], index: 4, kind: input, shape index: {}]
  %s5 = inlined_call_operand.vmem [shape: f32[1,32], index: 5, kind: input, shape index: {}]
  %s6 = inlined_call_operand.vmem [shape: bf16[32,128], index: 6, kind: input, shape index: {}]
  %s7 = inlined_call_operand.vmem [shape: f32[1,128], index: 7, kind: input, shape index: {}]
  %s8 = inlined_call_operand.vmem [shape: bf16[16,32], index: 8, kind: input, shape index: {}]
  %s9 = inlined_call_operand.vmem [shape: f32[1,32], index: 9, kind: input, shape index: {}]
  %s10 = inlined_call_operand.vmem [shape: bf16[32,32], index: 10, kind: input, shape index: {}]
  %s11 = inlined_call_operand.vmem [shape: f32[1,32], index: 11, kind: input, shape index: {}]
  %s12 = inlined_call_operand.vmem [shape: f32[1,32], index: 12, kind: input, shape index: {}]
  %s13 = inlined_call_operand.<no memory space> [shape: f32[1], index: 13, kind: input, shape index: {}]
  %s14 = inlined_call_operand.hbm [shape: f32[256,128], index: 14, kind: output, shape index: {}]
  %s15 = sld [smem:[#allocation0]]
  $region66: #{tpu_custom_call.1} parent=0
    _
  %s17 = ssub.s32 1, %s15
  %s18 = scalar_select 0, %s17, %s15
  %19 = sst [smem:[#allocation2]] %s13
  $region1: #{tpu_custom_call.1} parent=0
    #allocation3 [shape = 'u8[131072]{0}', space=vmem, size = 0x20000, scoped, tag = 'output window, operand 0, single buffered']
    #allocation4 [shape = 's32[1]{0}', space=sflag, size = 0x4, scoped, tag = 'scoped memory for tpu_custom_call.1']
    %20 = vsyncpa [#allocation4], 0
    // Predicated region
    $region2: #{tpu_custom_call.1} parent=1 // pred_check
      _
    $region3: #{tpu_custom_call.1} parent=1 // pred_check_branch
      %22 = sbr.rel (0) target = $region5
    $region4: #{tpu_custom_call.1} parent=1 // pred_region
      _
    $region5: #{tpu_custom_call.1} parent=1 // pred_fallthru
      _
    // Predicated region
    $region6: #{tpu_custom_call.1} parent=1 // pred_check
      _
    $region7: #{tpu_custom_call.1} parent=1 // pred_check_branch
      %24 = sbr.rel (0) target = $region9
    $region8: #{tpu_custom_call.1} parent=1 // pred_region
      _
    $region9: #{tpu_custom_call.1} parent=1 // pred_fallthru
      _
    // Predicated region
    $region10: #{tpu_custom_call.1} parent=1 // pred_check
      _
    $region11: #{tpu_custom_call.1} parent=1 // pred_check_branch
      %26 = sbr.rel (0) target = $region13
    $region12: #{tpu_custom_call.1} parent=1 // pred_region
      _
    $region13: #{tpu_custom_call.1} parent=1 // pred_fallthru
      _
    // Predicated region
    $region14: #{tpu_custom_call.1} parent=1 // pred_check
      _
    $region15: #{tpu_custom_call.1} parent=1 // pred_check_branch
      %28 = sbr.rel (0) target = $region17
    $region16: #{tpu_custom_call.1} parent=1 // pred_region
      _
    $region17: #{tpu_custom_call.1} parent=1 // pred_fallthru
      _
    // Predicated region
    $region18: #{tpu_custom_call.1} parent=1 // pred_check
      _
    $region19: #{tpu_custom_call.1} parent=1 // pred_check_branch
      %30 = sbr.rel (0) target = $region21
    $region20: #{tpu_custom_call.1} parent=1 // pred_region
      _
    $region21: #{tpu_custom_call.1} parent=1 // pred_fallthru
      _
    // Predicated region
    $region22: #{tpu_custom_call.1} parent=1 // pred_check
      _
    $region23: #{tpu_custom_call.1} parent=1 // pred_check_branch
      %32 = sbr.rel (0) target = $region25
    $region24: #{tpu_custom_call.1} parent=1 // pred_region
      _
    $region25: #{tpu_custom_call.1} parent=1 // pred_fallthru
      _
    // Predicated region
    $region26: #{tpu_custom_call.1} parent=1 // pred_check
      _
    $region27: #{tpu_custom_call.1} parent=1 // pred_check_branch
      %34 = sbr.rel (0) target = $region29
    $region28: #{tpu_custom_call.1} parent=1 // pred_region
      _
    $region29: #{tpu_custom_call.1} parent=1 // pred_fallthru
      _
    // Predicated region
    $region30: #{tpu_custom_call.1} parent=1 // pred_check
      _
    $region31: #{tpu_custom_call.1} parent=1 // pred_check_branch
      %36 = sbr.rel (0) target = $region33
    $region32: #{tpu_custom_call.1} parent=1 // pred_region
      _
    $region33: #{tpu_custom_call.1} parent=1 // pred_fallthru
      _
    // Predicated region
    $region34: #{tpu_custom_call.1} parent=1 // pred_check
      _
    $region35: #{tpu_custom_call.1} parent=1 // pred_check_branch
      %38 = sbr.rel (0) target = $region37
    $region36: #{tpu_custom_call.1} parent=1 // pred_region
      _
    $region37: #{tpu_custom_call.1} parent=1 // pred_fallthru
      _
    // Predicated region
    $region38: #{tpu_custom_call.1} parent=1 // pred_check
      _
    $region39: #{tpu_custom_call.1} parent=1 // pred_check_branch
      %40 = sbr.rel (0) target = $region41
    $region40: #{tpu_custom_call.1} parent=1 // pred_region
      _
    $region41: #{tpu_custom_call.1} parent=1 // pred_fallthru
      _
    // Predicated region
    $region42: #{tpu_custom_call.1} parent=1 // pred_check
      _
    $region43: #{tpu_custom_call.1} parent=1 // pred_check_branch
      %42 = sbr.rel (0) target = $region45
    $region44: #{tpu_custom_call.1} parent=1 // pred_region
      _
    $region45: #{tpu_custom_call.1} parent=1 // pred_fallthru
      _
    // Predicated region
    $region46: #{tpu_custom_call.1} parent=1 // pred_check
      _
    $region47: #{tpu_custom_call.1} parent=1 // pred_check_branch
      %44 = sbr.rel (0) target = $region49
    $region48: #{tpu_custom_call.1} parent=1 // pred_region
      _
    $region49: #{tpu_custom_call.1} parent=1 // pred_fallthru
      _
    // Predicated region
    $region50: #{tpu_custom_call.1} parent=1 // pred_check
      _
    $region51: #{tpu_custom_call.1} parent=1 // pred_check_branch
      %46 = sbr.rel (0) target = $region53
    $region52: #{tpu_custom_call.1} parent=1 // pred_region
      _
    $region53: #{tpu_custom_call.1} parent=1 // pred_fallthru
      _
    // Predicated region
    $region54: #{tpu_custom_call.1} parent=1 // pred_check
      _
    $region55: #{tpu_custom_call.1} parent=1 // pred_check_branch
      %48 = sbr.rel (0) target = $region57
    $region56: #{tpu_custom_call.1} parent=1 // pred_region
      _
    $region57: #{tpu_custom_call.1} parent=1 // pred_fallthru
      _
    %v50 = vld [vmem:[%s0] sm:$0xff]
    %v51 = vld [vmem:[%s0 + $0x8] sm:$0xff]
    %v52 = vld [vmem:[%s0 + $0x10] sm:$0xff]
    %v53 = vld [vmem:[%s0 + $0x18] sm:$0xff]
    %v54 = vld [vmem:[%s0 + $0x20] sm:$0xff]
    %v55 = vld [vmem:[%s0 + $0x28] sm:$0xff]
    %v56 = vld [vmem:[%s0 + $0x30] sm:$0xff]
    %v57 = vld [vmem:[%s0 + $0x38] sm:$0xff]
    %v58 = vld [vmem:[%s0 + $0x40] sm:$0xff]
    %v59 = vld [vmem:[%s0 + $0x48] sm:$0xff]
    %v60 = vld [vmem:[%s0 + $0x50] sm:$0xff]
    %v61 = vld [vmem:[%s0 + $0x58] sm:$0xff]
    %v62 = vld [vmem:[%s0 + $0x60] sm:$0xff]
    %v63 = vld [vmem:[%s0 + $0x68] sm:$0xff]
    %v64 = vld [vmem:[%s0 + $0x70] sm:$0xff]
    %v65 = vld [vmem:[%s0 + $0x78] sm:$0xff]
    %v66 = vld [vmem:[%s0 + $0x80] sm:$0xff]
    %v67 = vld [vmem:[%s0 + $0x88] sm:$0xff]
    %v68 = vld [vmem:[%s0 + $0x90] sm:$0xff]
    %v69 = vld [vmem:[%s0 + $0x98] sm:$0xff]
    %v70 = vld [vmem:[%s0 + $0xa0] sm:$0xff]
    %v71 = vld [vmem:[%s0 + $0xa8] sm:$0xff]
    %v72 = vld [vmem:[%s0 + $0xb0] sm:$0xff]
    %v73 = vld [vmem:[%s0 + $0xb8] sm:$0xff]
    %v74 = vld [vmem:[%s0 + $0xc0] sm:$0xff]
    %v75 = vld [vmem:[%s0 + $0xc8] sm:$0xff]
    %v76 = vld [vmem:[%s0 + $0xd0] sm:$0xff]
    %v77 = vld [vmem:[%s0 + $0xd8] sm:$0xff]
    %v78 = vld [vmem:[%s0 + $0xe0] sm:$0xff]
    %v79 = vld [vmem:[%s0 + $0xe8] sm:$0xff]
    %v80 = vld [vmem:[%s0 + $0xf0] sm:$0xff]
    %v81 = vld [vmem:[%s0 + $0xf8] sm:$0xff]
    %v82 = vpack.c.bf16 %v51, %v50
    %v83 = vpack.c.bf16 %v53, %v52
    %v84 = vpack.c.bf16 %v55, %v54
    %v85 = vpack.c.bf16 %v57, %v56
    %v86 = vpack.c.bf16 %v59, %v58
    %v87 = vpack.c.bf16 %v61, %v60
    %v88 = vpack.c.bf16 %v63, %v62
    %v89 = vpack.c.bf16 %v65, %v64
    %v90 = vpack.c.bf16 %v67, %v66
    %v91 = vpack.c.bf16 %v69, %v68
    %v92 = vpack.c.bf16 %v71, %v70
    %v93 = vpack.c.bf16 %v73, %v72
    %v94 = vpack.c.bf16 %v75, %v74
    %v95 = vpack.c.bf16 %v77, %v76
    %v96 = vpack.c.bf16 %v79, %v78
    %v97 = vpack.c.bf16 %v81, %v80
    %v98 = vld [vmem:[%s2] sm:$0xf]
    %v99 = vld [vmem:[%s2 + $0x4] sm:$0xf]
    %v100 = vld [vmem:[%s2 + $0x8] sm:$0xf]
    %v101 = vld [vmem:[%s2 + $0xc] sm:$0xf]
    %v102 = vld [vmem:[%s3] sm:$0x1]
    %v104 = vlaneseq
    %v105 = vshrl.u32 %v104, 7
    %v106 = vsub.s32 0, %v105
    %v107 = vrot.slane %v102, %v106
    %v113 = vunpack.c.l.b16 %v98
    %v114 = vunpack.c.l.b16 %v99
    %v115 = vunpack.c.l.b16 %v100
    %v116 = vunpack.c.l.b16 %v101
    %v117 = vpack.c.b16 %v114, %v113
    %v118 = vpack.c.b16 %v116, %v115
    %vm121 = vcmask 261120
    %v123 = vsel %vm121, %v82, 0
    %v126 = vsel %vm121, %v83, 0
    %v129 = vsel %vm121, %v84, 0
    %v132 = vsel %vm121, %v85, 0
    %v135 = vsel %vm121, %v86, 0
    %v138 = vsel %vm121, %v87, 0
    %v141 = vsel %vm121, %v88, 0
    %v144 = vsel %vm121, %v89, 0
    %v147 = vsel %vm121, %v90, 0
    %v150 = vsel %vm121, %v91, 0
    %v153 = vsel %vm121, %v92, 0
    %v156 = vsel %vm121, %v93, 0
    %v159 = vsel %vm121, %v94, 0
    %v162 = vsel %vm121, %v95, 0
    %v165 = vsel %vm121, %v96, 0
    %v168 = vsel %vm121, %v97, 0
    %170 = vmatprep.subr.bf16.mxu0 0
    %171 = vmatpush1.bf16.msra.mxu0 0
    %172 = vmatprep.subr.bf16.mxu0 0
    %173 = vmatpush1.bf16.msra.mxu0 0
    %174 = vmatprep.subr.bf16.mxu0 0
    %175 = vmatpush1.bf16.msra.mxu0 0
    %176 = vmatprep.subr.bf16.mxu0 0
    %177 = vmatpush1.bf16.msra.mxu0 0
    %178 = vmatprep.subr.bf16.mxu0 0
    %179 = vmatpush1.bf16.msra.mxu0 0
    %180 = vmatprep.subr.bf16.mxu0 0
    %181 = vmatpush1.bf16.msra.mxu0 0
    %182 = vmatprep.subr.bf16.mxu0 0
    %183 = vmatpush1.bf16.msra.mxu0 %v118
    %184 = vmatprep.subr.bf16.mxu0 0
    %185 = vmatpush1.bf16.msra.mxu0 %v117
    %186 = vmatprep.subr.bf16.mxu0 0
    %187 = vmatpush2.bf16.msra.mxu0 0
    %188 = vmatprep.subr.bf16.mxu0 0
    %189 = vmatpush2.bf16.msra.mxu0 0
    %190 = vmatprep.subr.bf16.mxu0 0
    %191 = vmatpush2.bf16.msra.mxu0 0
    %192 = vmatprep.subr.bf16.mxu0 0
    %193 = vmatpush2.bf16.msra.mxu0 0
    %194 = vmatprep.subr.bf16.mxu0 0
    %195 = vmatpush2.bf16.msra.mxu0 0
    %196 = vmatprep.subr.bf16.mxu0 0
    %197 = vmatpush2.bf16.msra.mxu0 0
    %198 = vmatprep.subr.bf16.mxu0 0
    %199 = vmatpush2.bf16.msra.mxu0 0
    %200 = vmatprep.subr.bf16.mxu0 0
    %201 = vmatpush2.bf16.msra.mxu0 0
    %202 = vmatprep.mubr.bf16.mxu0 0
    %203 = vmatmul.mubr.bf16.gmra.mxu0 %v123
    %v204 = vpop.f32.mrf.mxu0
    %v205 = vadd.f32 %v107, %v204
    %v206 = vpop.f32.mrf.mxu0
    %v207 = vpop.f32.mrf.mxu0
    %v208 = vadd.f32 %v107, %v207
    %v209 = vpop.f32.mrf.mxu0
    %210 = vmatprep.mubr.bf16.mxu0 0
    %211 = vmatmul.mubr.bf16.gmra.mxu0 %v126
    %v212 = vpop.f32.mrf.mxu0
    %v213 = vadd.f32 %v107, %v212
    %v214 = vpop.f32.mrf.mxu0
    %v215 = vpop.f32.mrf.mxu0
    %v216 = vadd.f32 %v107, %v215
    %v217 = vpop.f32.mrf.mxu0
    %218 = vmatprep.mubr.bf16.mxu0 0
    %219 = vmatmul.mubr.bf16.gmra.mxu0 %v129
    %v220 = vpop.f32.mrf.mxu0
    %v221 = vadd.f32 %v107, %v220
    %v222 = vpop.f32.mrf.mxu0
    %v223 = vpop.f32.mrf.mxu0
    %v224 = vadd.f32 %v107, %v223
    %v225 = vpop.f32.mrf.mxu0
    %226 = vmatprep.mubr.bf16.mxu0 0
    %227 = vmatmul.mubr.bf16.gmra.mxu0 %v132
    %v228 = vpop.f32.mrf.mxu0
    %v229 = vadd.f32 %v107, %v228
    %v230 = vpop.f32.mrf.mxu0
    %v231 = vpop.f32.mrf.mxu0
    %v232 = vadd.f32 %v107, %v231
    %v233 = vpop.f32.mrf.mxu0
    %234 = vmatprep.mubr.bf16.mxu0 0
    %235 = vmatmul.mubr.bf16.gmra.mxu0 %v135
    %v236 = vpop.f32.mrf.mxu0
    %v237 = vadd.f32 %v107, %v236
    %v238 = vpop.f32.mrf.mxu0
    %v239 = vpop.f32.mrf.mxu0
    %v240 = vadd.f32 %v107, %v239
    %v241 = vpop.f32.mrf.mxu0
    %242 = vmatprep.mubr.bf16.mxu0 0
    %243 = vmatmul.mubr.bf16.gmra.mxu0 %v138
    %v244 = vpop.f32.mrf.mxu0
    %v245 = vadd.f32 %v107, %v244
    %v246 = vpop.f32.mrf.mxu0
    %v247 = vpop.f32.mrf.mxu0
    %v248 = vadd.f32 %v107, %v247
    %v249 = vpop.f32.mrf.mxu0
    %250 = vmatprep.mubr.bf16.mxu0 0
    %251 = vmatmul.mubr.bf16.gmra.mxu0 %v141
    %v252 = vpop.f32.mrf.mxu0
    %v253 = vadd.f32 %v107, %v252
    %v254 = vpop.f32.mrf.mxu0
    %v255 = vpop.f32.mrf.mxu0
    %v256 = vadd.f32 %v107, %v255
    %v257 = vpop.f32.mrf.mxu0
    %258 = vmatprep.mubr.bf16.mxu0 0
    %259 = vmatmul.mubr.bf16.gmra.mxu0 %v144
    %v260 = vpop.f32.mrf.mxu0
    %v261 = vadd.f32 %v107, %v260
    %v262 = vpop.f32.mrf.mxu0
    %v263 = vpop.f32.mrf.mxu0
    %v264 = vadd.f32 %v107, %v263
    %v265 = vpop.f32.mrf.mxu0
    %266 = vmatprep.mubr.bf16.mxu0 0
    %267 = vmatmul.mubr.bf16.gmra.mxu0 %v147
    %v268 = vpop.f32.mrf.mxu0
    %v269 = vadd.f32 %v107, %v268
    %v270 = vpop.f32.mrf.mxu0
    %v271 = vpop.f32.mrf.mxu0
    %v272 = vadd.f32 %v107, %v271
    %v273 = vpop.f32.mrf.mxu0
    %274 = vmatprep.mubr.bf16.mxu0 0
    %275 = vmatmul.mubr.bf16.gmra.mxu0 %v150
    %v276 = vpop.f32.mrf.mxu0
    %v277 = vadd.f32 %v107, %v276
    %v278 = vpop.f32.mrf.mxu0
    %v279 = vpop.f32.mrf.mxu0
    %v280 = vadd.f32 %v107, %v279
    %v281 = vpop.f32.mrf.mxu0
    %282 = vmatprep.mubr.bf16.mxu0 0
    %283 = vmatmul.mubr.bf16.gmra.mxu0 %v153
    %v284 = vpop.f32.mrf.mxu0
    %v285 = vadd.f32 %v107, %v284
    %v286 = vpop.f32.mrf.mxu0
    %v287 = vpop.f32.mrf.mxu0
    %v288 = vadd.f32 %v107, %v287
    %v289 = vpop.f32.mrf.mxu0
    %290 = vmatprep.mubr.bf16.mxu0 0
    %291 = vmatmul.mubr.bf16.gmra.mxu0 %v156
    %v292 = vpop.f32.mrf.mxu0
    %v293 = vadd.f32 %v107, %v292
    %v294 = vpop.f32.mrf.mxu0
    %v295 = vpop.f32.mrf.mxu0
    %v296 = vadd.f32 %v107, %v295
    %v297 = vpop.f32.mrf.mxu0
    %298 = vmatprep.mubr.bf16.mxu0 0
    %299 = vmatmul.mubr.bf16.gmra.mxu0 %v159
    %v300 = vpop.f32.mrf.mxu0
    %v301 = vadd.f32 %v107, %v300
    %v302 = vpop.f32.mrf.mxu0
    %v303 = vpop.f32.mrf.mxu0
    %v304 = vadd.f32 %v107, %v303
    %v305 = vpop.f32.mrf.mxu0
    %306 = vmatprep.mubr.bf16.mxu0 0
    %307 = vmatmul.mubr.bf16.gmra.mxu0 %v162
    %v308 = vpop.f32.mrf.mxu0
    %v309 = vadd.f32 %v107, %v308
    %v310 = vpop.f32.mrf.mxu0
    %v311 = vpop.f32.mrf.mxu0
    %v312 = vadd.f32 %v107, %v311
    %v313 = vpop.f32.mrf.mxu0
    %314 = vmatprep.mubr.bf16.mxu0 0
    %315 = vmatmul.mubr.bf16.gmra.mxu0 %v165
    %v316 = vpop.f32.mrf.mxu0
    %v317 = vadd.f32 %v107, %v316
    %v318 = vpop.f32.mrf.mxu0
    %v319 = vpop.f32.mrf.mxu0
    %v320 = vadd.f32 %v107, %v319
    %v321 = vpop.f32.mrf.mxu0
    %322 = vmatprep.mubr.bf16.mxu0 0
    %323 = vmatmul.mubr.bf16.gmra.mxu0 %v168
    %v324 = vpop.f32.mrf.mxu0
    %v325 = vadd.f32 %v107, %v324
    %v326 = vpop.f32.mrf.mxu0
    %v327 = vpop.f32.mrf.mxu0
    %v328 = vadd.f32 %v107, %v327
    %v329 = vpop.f32.mrf.mxu0
    %330 = vdwg.mxu0
    %v331 = vmax.f32 %v205, 0.0
    %v332 = vmax.f32 %v208, 0.0
    %v333 = vmax.f32 %v213, 0.0
    %v334 = vmax.f32 %v216, 0.0
    %v335 = vmax.f32 %v221, 0.0
    %v336 = vmax.f32 %v224, 0.0
    %v337 = vmax.f32 %v229, 0.0
    %v338 = vmax.f32 %v232, 0.0
    %v339 = vmax.f32 %v237, 0.0
    %v340 = vmax.f32 %v240, 0.0
    %v341 = vmax.f32 %v245, 0.0
    %v342 = vmax.f32 %v248, 0.0
    %v343 = vmax.f32 %v253, 0.0
    %v344 = vmax.f32 %v256, 0.0
    %v345 = vmax.f32 %v261, 0.0
    %v346 = vmax.f32 %v264, 0.0
    %v347 = vmax.f32 %v269, 0.0
    %v348 = vmax.f32 %v272, 0.0
    %v349 = vmax.f32 %v277, 0.0
    %v350 = vmax.f32 %v280, 0.0
    %v351 = vmax.f32 %v285, 0.0
    %v352 = vmax.f32 %v288, 0.0
    %v353 = vmax.f32 %v293, 0.0
    %v354 = vmax.f32 %v296, 0.0
    %v355 = vmax.f32 %v301, 0.0
    %v356 = vmax.f32 %v304, 0.0
    %v357 = vmax.f32 %v309, 0.0
    %v358 = vmax.f32 %v312, 0.0
    %v359 = vmax.f32 %v317, 0.0
    %v360 = vmax.f32 %v320, 0.0
    %v361 = vmax.f32 %v325, 0.0
    %v362 = vmax.f32 %v328, 0.0
    %v363 = vpack.c.bf16 %v332, %v331
    %v364 = vpack.c.bf16 %v334, %v333
    %v365 = vpack.c.bf16 %v336, %v335
    %v366 = vpack.c.bf16 %v338, %v337
    %v367 = vpack.c.bf16 %v340, %v339
    %v368 = vpack.c.bf16 %v342, %v341
    %v369 = vpack.c.bf16 %v344, %v343
    %v370 = vpack.c.bf16 %v346, %v345
    %v371 = vpack.c.bf16 %v348, %v347
    %v372 = vpack.c.bf16 %v350, %v349
    %v373 = vpack.c.bf16 %v352, %v351
    %v374 = vpack.c.bf16 %v354, %v353
    %v375 = vpack.c.bf16 %v356, %v355
    %v376 = vpack.c.bf16 %v358, %v357
    %v377 = vpack.c.bf16 %v360, %v359
    %v378 = vpack.c.bf16 %v362, %v361
    %v379 = vld [vmem:[%s4] sm:$0xf]
    %v380 = vld [vmem:[%s4 + $0x4] sm:$0xf]
    %v381 = vld [vmem:[%s4 + $0x8] sm:$0xf]
    %v382 = vld [vmem:[%s4 + $0xc] sm:$0xf]
    %v383 = vld [vmem:[%s5] sm:$0x1]
    %v385 = vlaneseq
    %v386 = vshrl.u32 %v385, 7
    %v387 = vsub.s32 0, %v386
    %v388 = vrot.slane %v383, %v387
    %v394 = vunpack.c.l.b16 %v379
    %v395 = vunpack.c.l.b16 %v380
    %v396 = vunpack.c.l.b16 %v381
    %v397 = vunpack.c.l.b16 %v382
    %v398 = vpack.c.b16 %v395, %v394
    %v399 = vpack.c.b16 %v397, %v396
    %v403 = vsel %vm121, %v363, 0
    %v406 = vsel %vm121, %v364, 0
    %v409 = vsel %vm121, %v365, 0
    %v412 = vsel %vm121, %v366, 0
    %v415 = vsel %vm121, %v367, 0
    %v418 = vsel %vm121, %v368, 0
    %v421 = vsel %vm121, %v369, 0
    %v424 = vsel %vm121, %v370, 0
    %v427 = vsel %vm121, %v371, 0
    %v430 = vsel %vm121, %v372, 0
    %v433 = vsel %vm121, %v373, 0
    %v436 = vsel %vm121, %v374, 0
    %v439 = vsel %vm121, %v375, 0
    %v442 = vsel %vm121, %v376, 0
    %v445 = vsel %vm121, %v377, 0
    %v448 = vsel %vm121, %v378, 0
    %450 = vmatprep.subr.bf16.mxu0 0
    %451 = vmatpush1.bf16.msra.mxu0 0
    %452 = vmatprep.subr.bf16.mxu0 0
    %453 = vmatpush1.bf16.msra.mxu0 0
    %454 = vmatprep.subr.bf16.mxu0 0
    %455 = vmatpush1.bf16.msra.mxu0 0
    %456 = vmatprep.subr.bf16.mxu0 0
    %457 = vmatpush1.bf16.msra.mxu0 0
    %458 = vmatprep.subr.bf16.mxu0 0
    %459 = vmatpush1.bf16.msra.mxu0 0
    %460 = vmatprep.subr.bf16.mxu0 0
    %461 = vmatpush1.bf16.msra.mxu0 0
    %462 = vmatprep.subr.bf16.mxu0 0
    %463 = vmatpush1.bf16.msra.mxu0 %v399
    %464 = vmatprep.subr.bf16.mxu0 0
    %465 = vmatpush1.bf16.msra.mxu0 %v398
    %466 = vmatprep.subr.bf16.mxu0 0
    %467 = vmatpush2.bf16.msra.mxu0 0
    %468 = vmatprep.subr.bf16.mxu0 0
    %469 = vmatpush2.bf16.msra.mxu0 0
    %470 = vmatprep.subr.bf16.mxu0 0
    %471 = vmatpush2.bf16.msra.mxu0 0
    %472 = vmatprep.subr.bf16.mxu0 0
    %473 = vmatpush2.bf16.msra.mxu0 0
    %474 = vmatprep.subr.bf16.mxu0 0
    %475 = vmatpush2.bf16.msra.mxu0 0
    %476 = vmatprep.subr.bf16.mxu0 0
    %477 = vmatpush2.bf16.msra.mxu0 0
    %478 = vmatprep.subr.bf16.mxu0 0
    %479 = vmatpush2.bf16.msra.mxu0 0
    %480 = vmatprep.subr.bf16.mxu0 0
    %481 = vmatpush2.bf16.msra.mxu0 0
    %482 = vmatprep.mubr.bf16.mxu0 0
    %483 = vmatmul.mubr.bf16.gmra.mxu0 %v403
    %v484 = vpop.f32.mrf.mxu0
    %v485 = vadd.f32 %v388, %v484
    %v486 = vpop.f32.mrf.mxu0
    %v487 = vpop.f32.mrf.mxu0
    %v488 = vadd.f32 %v388, %v487
    %v489 = vpop.f32.mrf.mxu0
    %490 = vmatprep.mubr.bf16.mxu0 0
    %491 = vmatmul.mubr.bf16.gmra.mxu0 %v406
    %v492 = vpop.f32.mrf.mxu0
    %v493 = vadd.f32 %v388, %v492
    %v494 = vpop.f32.mrf.mxu0
    %v495 = vpop.f32.mrf.mxu0
    %v496 = vadd.f32 %v388, %v495
    %v497 = vpop.f32.mrf.mxu0
    %498 = vmatprep.mubr.bf16.mxu0 0
    %499 = vmatmul.mubr.bf16.gmra.mxu0 %v409
    %v500 = vpop.f32.mrf.mxu0
    %v501 = vadd.f32 %v388, %v500
    %v502 = vpop.f32.mrf.mxu0
    %v503 = vpop.f32.mrf.mxu0
    %v504 = vadd.f32 %v388, %v503
    %v505 = vpop.f32.mrf.mxu0
    %506 = vmatprep.mubr.bf16.mxu0 0
    %507 = vmatmul.mubr.bf16.gmra.mxu0 %v412
    %v508 = vpop.f32.mrf.mxu0
    %v509 = vadd.f32 %v388, %v508
    %v510 = vpop.f32.mrf.mxu0
    %v511 = vpop.f32.mrf.mxu0
    %v512 = vadd.f32 %v388, %v511
    %v513 = vpop.f32.mrf.mxu0
    %514 = vmatprep.mubr.bf16.mxu0 0
    %515 = vmatmul.mubr.bf16.gmra.mxu0 %v415
    %v516 = vpop.f32.mrf.mxu0
    %v517 = vadd.f32 %v388, %v516
    %v518 = vpop.f32.mrf.mxu0
    %v519 = vpop.f32.mrf.mxu0
    %v520 = vadd.f32 %v388, %v519
    %v521 = vpop.f32.mrf.mxu0
    %522 = vmatprep.mubr.bf16.mxu0 0
    %523 = vmatmul.mubr.bf16.gmra.mxu0 %v418
    %v524 = vpop.f32.mrf.mxu0
    %v525 = vadd.f32 %v388, %v524
    %v526 = vpop.f32.mrf.mxu0
    %v527 = vpop.f32.mrf.mxu0
    %v528 = vadd.f32 %v388, %v527
    %v529 = vpop.f32.mrf.mxu0
    %530 = vmatprep.mubr.bf16.mxu0 0
    %531 = vmatmul.mubr.bf16.gmra.mxu0 %v421
    %v532 = vpop.f32.mrf.mxu0
    %v533 = vadd.f32 %v388, %v532
    %v534 = vpop.f32.mrf.mxu0
    %v535 = vpop.f32.mrf.mxu0
    %v536 = vadd.f32 %v388, %v535
    %v537 = vpop.f32.mrf.mxu0
    %538 = vmatprep.mubr.bf16.mxu0 0
    %539 = vmatmul.mubr.bf16.gmra.mxu0 %v424
    %v540 = vpop.f32.mrf.mxu0
    %v541 = vadd.f32 %v388, %v540
    %v542 = vpop.f32.mrf.mxu0
    %v543 = vpop.f32.mrf.mxu0
    %v544 = vadd.f32 %v388, %v543
    %v545 = vpop.f32.mrf.mxu0
    %546 = vmatprep.mubr.bf16.mxu0 0
    %547 = vmatmul.mubr.bf16.gmra.mxu0 %v427
    %v548 = vpop.f32.mrf.mxu0
    %v549 = vadd.f32 %v388, %v548
    %v550 = vpop.f32.mrf.mxu0
    %v551 = vpop.f32.mrf.mxu0
    %v552 = vadd.f32 %v388, %v551
    %v553 = vpop.f32.mrf.mxu0
    %554 = vmatprep.mubr.bf16.mxu0 0
    %555 = vmatmul.mubr.bf16.gmra.mxu0 %v430
    %v556 = vpop.f32.mrf.mxu0
    %v557 = vadd.f32 %v388, %v556
    %v558 = vpop.f32.mrf.mxu0
    %v559 = vpop.f32.mrf.mxu0
    %v560 = vadd.f32 %v388, %v559
    %v561 = vpop.f32.mrf.mxu0
    %562 = vmatprep.mubr.bf16.mxu0 0
    %563 = vmatmul.mubr.bf16.gmra.mxu0 %v433
    %v564 = vpop.f32.mrf.mxu0
    %v565 = vadd.f32 %v388, %v564
    %v566 = vpop.f32.mrf.mxu0
    %v567 = vpop.f32.mrf.mxu0
    %v568 = vadd.f32 %v388, %v567
    %v569 = vpop.f32.mrf.mxu0
    %570 = vmatprep.mubr.bf16.mxu0 0
    %571 = vmatmul.mubr.bf16.gmra.mxu0 %v436
    %v572 = vpop.f32.mrf.mxu0
    %v573 = vadd.f32 %v388, %v572
    %v574 = vpop.f32.mrf.mxu0
    %v575 = vpop.f32.mrf.mxu0
    %v576 = vadd.f32 %v388, %v575
    %v577 = vpop.f32.mrf.mxu0
    %578 = vmatprep.mubr.bf16.mxu0 0
    %579 = vmatmul.mubr.bf16.gmra.mxu0 %v439
    %v580 = vpop.f32.mrf.mxu0
    %v581 = vadd.f32 %v388, %v580
    %v582 = vpop.f32.mrf.mxu0
    %v583 = vpop.f32.mrf.mxu0
    %v584 = vadd.f32 %v388, %v583
    %v585 = vpop.f32.mrf.mxu0
    %586 = vmatprep.mubr.bf16.mxu0 0
    %587 = vmatmul.mubr.bf16.gmra.mxu0 %v442
    %v588 = vpop.f32.mrf.mxu0
    %v589 = vadd.f32 %v388, %v588
    %v590 = vpop.f32.mrf.mxu0
    %v591 = vpop.f32.mrf.mxu0
    %v592 = vadd.f32 %v388, %v591
    %v593 = vpop.f32.mrf.mxu0
    %594 = vmatprep.mubr.bf16.mxu0 0
    %595 = vmatmul.mubr.bf16.gmra.mxu0 %v445
    %v596 = vpop.f32.mrf.mxu0
    %v597 = vadd.f32 %v388, %v596
    %v598 = vpop.f32.mrf.mxu0
    %v599 = vpop.f32.mrf.mxu0
    %v600 = vadd.f32 %v388, %v599
    %v601 = vpop.f32.mrf.mxu0
    %602 = vmatprep.mubr.bf16.mxu0 0
    %603 = vmatmul.mubr.bf16.gmra.mxu0 %v448
    %v604 = vpop.f32.mrf.mxu0
    %v605 = vadd.f32 %v388, %v604
    %v606 = vpop.f32.mrf.mxu0
    %v607 = vpop.f32.mrf.mxu0
    %v608 = vadd.f32 %v388, %v607
    %v609 = vpop.f32.mrf.mxu0
    %610 = vdwg.mxu0
    %v611 = vmax.f32 %v485, 0.0
    %v612 = vmax.f32 %v488, 0.0
    %v613 = vmax.f32 %v493, 0.0
    %v614 = vmax.f32 %v496, 0.0
    %v615 = vmax.f32 %v501, 0.0
    %v616 = vmax.f32 %v504, 0.0
    %v617 = vmax.f32 %v509, 0.0
    %v618 = vmax.f32 %v512, 0.0
    %v619 = vmax.f32 %v517, 0.0
    %v620 = vmax.f32 %v520, 0.0
    %v621 = vmax.f32 %v525, 0.0
    %v622 = vmax.f32 %v528, 0.0
    %v623 = vmax.f32 %v533, 0.0
    %v624 = vmax.f32 %v536, 0.0
    %v625 = vmax.f32 %v541, 0.0
    %v626 = vmax.f32 %v544, 0.0
    %v627 = vmax.f32 %v549, 0.0
    %v628 = vmax.f32 %v552, 0.0
    %v629 = vmax.f32 %v557, 0.0
    %v630 = vmax.f32 %v560, 0.0
    %v631 = vmax.f32 %v565, 0.0
    %v632 = vmax.f32 %v568, 0.0
    %v633 = vmax.f32 %v573, 0.0
    %v634 = vmax.f32 %v576, 0.0
    %v635 = vmax.f32 %v581, 0.0
    %v636 = vmax.f32 %v584, 0.0
    %v637 = vmax.f32 %v589, 0.0
    %v638 = vmax.f32 %v592, 0.0
    %v639 = vmax.f32 %v597, 0.0
    %v640 = vmax.f32 %v600, 0.0
    %v641 = vmax.f32 %v605, 0.0
    %v642 = vmax.f32 %v608, 0.0
    %v643 = vpack.c.bf16 %v612, %v611
    %v644 = vpack.c.bf16 %v614, %v613
    %v645 = vpack.c.bf16 %v616, %v615
    %v646 = vpack.c.bf16 %v618, %v617
    %v647 = vpack.c.bf16 %v620, %v619
    %v648 = vpack.c.bf16 %v622, %v621
    %v649 = vpack.c.bf16 %v624, %v623
    %v650 = vpack.c.bf16 %v626, %v625
    %v651 = vpack.c.bf16 %v628, %v627
    %v652 = vpack.c.bf16 %v630, %v629
    %v653 = vpack.c.bf16 %v632, %v631
    %v654 = vpack.c.bf16 %v634, %v633
    %v655 = vpack.c.bf16 %v636, %v635
    %v656 = vpack.c.bf16 %v638, %v637
    %v657 = vpack.c.bf16 %v640, %v639
    %v658 = vpack.c.bf16 %v642, %v641
    %v659 = vld [vmem:[%s6] sm:$0xf]
    %v660 = vld [vmem:[%s6 + $0x4] sm:$0xf]
    %v661 = vld [vmem:[%s6 + $0x8] sm:$0xf]
    %v662 = vld [vmem:[%s6 + $0xc] sm:$0xf]
    %v663 = vld [vmem:[%s7] sm:$0x1]
    %v665 = vlaneseq
    %v666 = vshrl.u32 %v665, 7
    %v667 = vsub.s32 0, %v666
    %v668 = vrot.slane %v663, %v667
    %v674 = vunpack.c.l.b16 %v659
    %v675 = vunpack.c.l.b16 %v660
    %v676 = vunpack.c.l.b16 %v661
    %v677 = vunpack.c.l.b16 %v662
    %v678 = vpack.c.b16 %v675, %v674
    %v679 = vpack.c.b16 %v677, %v676
    %v683 = vsel %vm121, %v643, 0
    %v686 = vsel %vm121, %v644, 0
    %v689 = vsel %vm121, %v645, 0
    %v692 = vsel %vm121, %v646, 0
    %v695 = vsel %vm121, %v647, 0
    %v698 = vsel %vm121, %v648, 0
    %v701 = vsel %vm121, %v649, 0
    %v704 = vsel %vm121, %v650, 0
    %v707 = vsel %vm121, %v651, 0
    %v710 = vsel %vm121, %v652, 0
    %v713 = vsel %vm121, %v653, 0
    %v716 = vsel %vm121, %v654, 0
    %v719 = vsel %vm121, %v655, 0
    %v722 = vsel %vm121, %v656, 0
    %v725 = vsel %vm121, %v657, 0
    %v728 = vsel %vm121, %v658, 0
    %730 = vmatprep.subr.bf16.mxu0 0
    %731 = vmatpush1.bf16.msra.mxu0 0
    %732 = vmatprep.subr.bf16.mxu0 0
    %733 = vmatpush1.bf16.msra.mxu0 0
    %734 = vmatprep.subr.bf16.mxu0 0
    %735 = vmatpush1.bf16.msra.mxu0 0
    %736 = vmatprep.subr.bf16.mxu0 0
    %737 = vmatpush1.bf16.msra.mxu0 0
    %738 = vmatprep.subr.bf16.mxu0 0
    %739 = vmatpush1.bf16.msra.mxu0 0
    %740 = vmatprep.subr.bf16.mxu0 0
    %741 = vmatpush1.bf16.msra.mxu0 0
    %742 = vmatprep.subr.bf16.mxu0 0
    %743 = vmatpush1.bf16.msra.mxu0 %v679
    %744 = vmatprep.subr.bf16.mxu0 0
    %745 = vmatpush1.bf16.msra.mxu0 %v678
    %746 = vmatprep.subr.bf16.mxu0 0
    %747 = vmatpush2.bf16.msra.mxu0 0
    %748 = vmatprep.subr.bf16.mxu0 0
    %749 = vmatpush2.bf16.msra.mxu0 0
    %750 = vmatprep.subr.bf16.mxu0 0
    %751 = vmatpush2.bf16.msra.mxu0 0
    %752 = vmatprep.subr.bf16.mxu0 0
    %753 = vmatpush2.bf16.msra.mxu0 0
    %754 = vmatprep.subr.bf16.mxu0 0
    %755 = vmatpush2.bf16.msra.mxu0 0
    %756 = vmatprep.subr.bf16.mxu0 0
    %757 = vmatpush2.bf16.msra.mxu0 0
    %758 = vmatprep.subr.bf16.mxu0 0
    %759 = vmatpush2.bf16.msra.mxu0 0
    %760 = vmatprep.subr.bf16.mxu0 0
    %761 = vmatpush2.bf16.msra.mxu0 0
    %762 = vmatprep.mubr.bf16.mxu0 0
    %763 = vmatmul.mubr.bf16.gmra.mxu0 %v683
    %v764 = vpop.f32.mrf.mxu0
    %v765 = vadd.f32 %v668, %v764
    %v766 = vpop.f32.mrf.mxu0
    %v767 = vpop.f32.mrf.mxu0
    %v768 = vadd.f32 %v668, %v767
    %v769 = vpop.f32.mrf.mxu0
    %770 = vmatprep.mubr.bf16.mxu0 0
    %771 = vmatmul.mubr.bf16.gmra.mxu0 %v686
    %v772 = vpop.f32.mrf.mxu0
    %v773 = vadd.f32 %v668, %v772
    %v774 = vpop.f32.mrf.mxu0
    %v775 = vpop.f32.mrf.mxu0
    %v776 = vadd.f32 %v668, %v775
    %v777 = vpop.f32.mrf.mxu0
    %778 = vmatprep.mubr.bf16.mxu0 0
    %779 = vmatmul.mubr.bf16.gmra.mxu0 %v689
    %v780 = vpop.f32.mrf.mxu0
    %v781 = vadd.f32 %v668, %v780
    %v782 = vpop.f32.mrf.mxu0
    %v783 = vpop.f32.mrf.mxu0
    %v784 = vadd.f32 %v668, %v783
    %v785 = vpop.f32.mrf.mxu0
    %786 = vmatprep.mubr.bf16.mxu0 0
    %787 = vmatmul.mubr.bf16.gmra.mxu0 %v692
    %v788 = vpop.f32.mrf.mxu0
    %v789 = vadd.f32 %v668, %v788
    %v790 = vpop.f32.mrf.mxu0
    %v791 = vpop.f32.mrf.mxu0
    %v792 = vadd.f32 %v668, %v791
    %v793 = vpop.f32.mrf.mxu0
    %794 = vmatprep.mubr.bf16.mxu0 0
    %795 = vmatmul.mubr.bf16.gmra.mxu0 %v695
    %v796 = vpop.f32.mrf.mxu0
    %v797 = vadd.f32 %v668, %v796
    %v798 = vpop.f32.mrf.mxu0
    %v799 = vpop.f32.mrf.mxu0
    %v800 = vadd.f32 %v668, %v799
    %v801 = vpop.f32.mrf.mxu0
    %802 = vmatprep.mubr.bf16.mxu0 0
    %803 = vmatmul.mubr.bf16.gmra.mxu0 %v698
    %v804 = vpop.f32.mrf.mxu0
    %v805 = vadd.f32 %v668, %v804
    %v806 = vpop.f32.mrf.mxu0
    %v807 = vpop.f32.mrf.mxu0
    %v808 = vadd.f32 %v668, %v807
    %v809 = vpop.f32.mrf.mxu0
    %810 = vmatprep.mubr.bf16.mxu0 0
    %811 = vmatmul.mubr.bf16.gmra.mxu0 %v701
    %v812 = vpop.f32.mrf.mxu0
    %v813 = vadd.f32 %v668, %v812
    %v814 = vpop.f32.mrf.mxu0
    %v815 = vpop.f32.mrf.mxu0
    %v816 = vadd.f32 %v668, %v815
    %v817 = vpop.f32.mrf.mxu0
    %818 = vmatprep.mubr.bf16.mxu0 0
    %819 = vmatmul.mubr.bf16.gmra.mxu0 %v704
    %v820 = vpop.f32.mrf.mxu0
    %v821 = vadd.f32 %v668, %v820
    %v822 = vpop.f32.mrf.mxu0
    %v823 = vpop.f32.mrf.mxu0
    %v824 = vadd.f32 %v668, %v823
    %v825 = vpop.f32.mrf.mxu0
    %826 = vmatprep.mubr.bf16.mxu0 0
    %827 = vmatmul.mubr.bf16.gmra.mxu0 %v707
    %v828 = vpop.f32.mrf.mxu0
    %v829 = vadd.f32 %v668, %v828
    %v830 = vpop.f32.mrf.mxu0
    %v831 = vpop.f32.mrf.mxu0
    %v832 = vadd.f32 %v668, %v831
    %v833 = vpop.f32.mrf.mxu0
    %834 = vmatprep.mubr.bf16.mxu0 0
    %835 = vmatmul.mubr.bf16.gmra.mxu0 %v710
    %v836 = vpop.f32.mrf.mxu0
    %v837 = vadd.f32 %v668, %v836
    %v838 = vpop.f32.mrf.mxu0
    %v839 = vpop.f32.mrf.mxu0
    %v840 = vadd.f32 %v668, %v839
    %v841 = vpop.f32.mrf.mxu0
    %842 = vmatprep.mubr.bf16.mxu0 0
    %843 = vmatmul.mubr.bf16.gmra.mxu0 %v713
    %v844 = vpop.f32.mrf.mxu0
    %v845 = vadd.f32 %v668, %v844
    %v846 = vpop.f32.mrf.mxu0
    %v847 = vpop.f32.mrf.mxu0
    %v848 = vadd.f32 %v668, %v847
    %v849 = vpop.f32.mrf.mxu0
    %850 = vmatprep.mubr.bf16.mxu0 0
    %851 = vmatmul.mubr.bf16.gmra.mxu0 %v716
    %v852 = vpop.f32.mrf.mxu0
    %v853 = vadd.f32 %v668, %v852
    %v854 = vpop.f32.mrf.mxu0
    %v855 = vpop.f32.mrf.mxu0
    %v856 = vadd.f32 %v668, %v855
    %v857 = vpop.f32.mrf.mxu0
    %858 = vmatprep.mubr.bf16.mxu0 0
    %859 = vmatmul.mubr.bf16.gmra.mxu0 %v719
    %v860 = vpop.f32.mrf.mxu0
    %v861 = vadd.f32 %v668, %v860
    %v862 = vpop.f32.mrf.mxu0
    %v863 = vpop.f32.mrf.mxu0
    %v864 = vadd.f32 %v668, %v863
    %v865 = vpop.f32.mrf.mxu0
    %866 = vmatprep.mubr.bf16.mxu0 0
    %867 = vmatmul.mubr.bf16.gmra.mxu0 %v722
    %v868 = vpop.f32.mrf.mxu0
    %v869 = vadd.f32 %v668, %v868
    %v870 = vpop.f32.mrf.mxu0
    %v871 = vpop.f32.mrf.mxu0
    %v872 = vadd.f32 %v668, %v871
    %v873 = vpop.f32.mrf.mxu0
    %874 = vmatprep.mubr.bf16.mxu0 0
    %875 = vmatmul.mubr.bf16.gmra.mxu0 %v725
    %v876 = vpop.f32.mrf.mxu0
    %v877 = vadd.f32 %v668, %v876
    %v878 = vpop.f32.mrf.mxu0
    %v879 = vpop.f32.mrf.mxu0
    %v880 = vadd.f32 %v668, %v879
    %v881 = vpop.f32.mrf.mxu0
    %882 = vmatprep.mubr.bf16.mxu0 0
    %883 = vmatmul.mubr.bf16.gmra.mxu0 %v728
    %v884 = vpop.f32.mrf.mxu0
    %v885 = vadd.f32 %v668, %v884
    %v886 = vpop.f32.mrf.mxu0
    %v887 = vpop.f32.mrf.mxu0
    %v888 = vadd.f32 %v668, %v887
    %v889 = vpop.f32.mrf.mxu0
    %890 = vdwg.mxu0
    %v891 = vmul.f32 %v765, 0.5
    %v892 = vmul.f32 %v768, 0.5
    %v893 = vmul.f32 %v773, 0.5
    %v894 = vmul.f32 %v776, 0.5
    %v895 = vmul.f32 %v781, 0.5
    %v896 = vmul.f32 %v784, 0.5
    %v897 = vmul.f32 %v789, 0.5
    %v898 = vmul.f32 %v792, 0.5
    %v899 = vmul.f32 %v797, 0.5
    %v900 = vmul.f32 %v800, 0.5
    %v901 = vmul.f32 %v805, 0.5
    %v902 = vmul.f32 %v808, 0.5
    %v903 = vmul.f32 %v813, 0.5
    %v904 = vmul.f32 %v816, 0.5
    %v905 = vmul.f32 %v821, 0.5
    %v906 = vmul.f32 %v824, 0.5
    %v907 = vmul.f32 %v829, 0.5
    %v908 = vmul.f32 %v832, 0.5
    %v909 = vmul.f32 %v837, 0.5
    %v910 = vmul.f32 %v840, 0.5
    %v911 = vmul.f32 %v845, 0.5
    %v912 = vmul.f32 %v848, 0.5
    %v913 = vmul.f32 %v853, 0.5
    %v914 = vmul.f32 %v856, 0.5
    %v915 = vmul.f32 %v861, 0.5
    %v916 = vmul.f32 %v864, 0.5
    %v917 = vmul.f32 %v869, 0.5
    %v918 = vmul.f32 %v872, 0.5
    %v919 = vmul.f32 %v877, 0.5
    %v920 = vmul.f32 %v880, 0.5
    %v921 = vmul.f32 %v885, 0.5
    %v922 = vmul.f32 %v888, 0.5
    %v923 = vmul.f32 %v891, 1.442695
    %v924 = vpow.pop %v923
    %v925 = vmul.f32 %v892, 1.442695
    %v926 = vpow.pop %v925
    %v927 = vmul.f32 %v893, 1.442695
    %v928 = vpow.pop %v927
    %v929 = vmul.f32 %v894, 1.442695
    %v930 = vpow.pop %v929
    %v931 = vmul.f32 %v895, 1.442695
    %v932 = vpow.pop %v931
    %v933 = vmul.f32 %v896, 1.442695
    %v934 = vpow.pop %v933
    %v935 = vmul.f32 %v897, 1.442695
    %v936 = vpow.pop %v935
    %v937 = vmul.f32 %v898, 1.442695
    %v938 = vpow.pop %v937
    %v939 = vmul.f32 %v899, 1.442695
    %v940 = vpow.pop %v939
    %v941 = vmul.f32 %v900, 1.442695
    %v942 = vpow.pop %v941
    %v943 = vmul.f32 %v901, 1.442695
    %v944 = vpow.pop %v943
    %v945 = vmul.f32 %v902, 1.442695
    %v946 = vpow.pop %v945
    %v947 = vmul.f32 %v903, 1.442695
    %v948 = vpow.pop %v947
    %v949 = vmul.f32 %v904, 1.442695
    %v950 = vpow.pop %v949
    %v951 = vmul.f32 %v905, 1.442695
    %v952 = vpow.pop %v951
    %v953 = vmul.f32 %v906, 1.442695
    %v954 = vpow.pop %v953
    %v955 = vmul.f32 %v907, 1.442695
    %v956 = vpow.pop %v955
    %v957 = vmul.f32 %v908, 1.442695
    %v958 = vpow.pop %v957
    %v959 = vmul.f32 %v909, 1.442695
    %v960 = vpow.pop %v959
    %v961 = vmul.f32 %v910, 1.442695
    %v962 = vpow.pop %v961
    %v963 = vmul.f32 %v911, 1.442695
    %v964 = vpow.pop %v963
    %v965 = vmul.f32 %v912, 1.442695
    %v966 = vpow.pop %v965
    %v967 = vmul.f32 %v913, 1.442695
    %v968 = vpow.pop %v967
    %v969 = vmul.f32 %v914, 1.442695
    %v970 = vpow.pop %v969
    %v971 = vmul.f32 %v915, 1.442695
    %v972 = vpow.pop %v971
    %v973 = vmul.f32 %v916, 1.442695
    %v974 = vpow.pop %v973
    %v975 = vmul.f32 %v917, 1.442695
    %v976 = vpow.pop %v975
    %v977 = vmul.f32 %v918, 1.442695
    %v978 = vpow.pop %v977
    %v979 = vmul.f32 %v919, 1.442695
    %v980 = vpow.pop %v979
    %v981 = vmul.f32 %v920, 1.442695
    %v982 = vpow.pop %v981
    %v983 = vmul.f32 %v921, 1.442695
    %v984 = vpow.pop %v983
    %v985 = vmul.f32 %v922, 1.442695
    %v986 = vpow.pop %v985
    %v987 = vld [vmem:[%s1] sm:$0xff]
    %v988 = vld [vmem:[%s1 + $0x8] sm:$0xff]
    %v989 = vld [vmem:[%s1 + $0x10] sm:$0xff]
    %v990 = vld [vmem:[%s1 + $0x18] sm:$0xff]
    %v991 = vld [vmem:[%s1 + $0x20] sm:$0xff]
    %v992 = vld [vmem:[%s1 + $0x28] sm:$0xff]
    %v993 = vld [vmem:[%s1 + $0x30] sm:$0xff]
    %v994 = vld [vmem:[%s1 + $0x38] sm:$0xff]
    %v995 = vld [vmem:[%s1 + $0x40] sm:$0xff]
    %v996 = vld [vmem:[%s1 + $0x48] sm:$0xff]
    %v997 = vld [vmem:[%s1 + $0x50] sm:$0xff]
    %v998 = vld [vmem:[%s1 + $0x58] sm:$0xff]
    %v999 = vld [vmem:[%s1 + $0x60] sm:$0xff]
    %v1000 = vld [vmem:[%s1 + $0x68] sm:$0xff]
    %v1001 = vld [vmem:[%s1 + $0x70] sm:$0xff]
    %v1002 = vld [vmem:[%s1 + $0x78] sm:$0xff]
    %v1003 = vld [vmem:[%s1 + $0x80] sm:$0xff]
    %v1004 = vld [vmem:[%s1 + $0x88] sm:$0xff]
    %v1005 = vld [vmem:[%s1 + $0x90] sm:$0xff]
    %v1006 = vld [vmem:[%s1 + $0x98] sm:$0xff]
    %v1007 = vld [vmem:[%s1 + $0xa0] sm:$0xff]
    %v1008 = vld [vmem:[%s1 + $0xa8] sm:$0xff]
    %v1009 = vld [vmem:[%s1 + $0xb0] sm:$0xff]
    %v1010 = vld [vmem:[%s1 + $0xb8] sm:$0xff]
    %v1011 = vld [vmem:[%s1 + $0xc0] sm:$0xff]
    %v1012 = vld [vmem:[%s1 + $0xc8] sm:$0xff]
    %v1013 = vld [vmem:[%s1 + $0xd0] sm:$0xff]
    %v1014 = vld [vmem:[%s1 + $0xd8] sm:$0xff]
    %v1015 = vld [vmem:[%s1 + $0xe0] sm:$0xff]
    %v1016 = vld [vmem:[%s1 + $0xe8] sm:$0xff]
    %v1017 = vld [vmem:[%s1 + $0xf0] sm:$0xff]
    %v1018 = vld [vmem:[%s1 + $0xf8] sm:$0xff]
    %1051 = vrot.lane.b32.xlu0 %v987, 48
    %v1052 = vpop.permute.xlu0 %1051
    %1053 = vrot.lane.b32.xlu0 %v988, 48
    %v1054 = vpop.permute.xlu0 %1053
    %1055 = vrot.lane.b32.xlu0 %v989, 48
    %v1056 = vpop.permute.xlu0 %1055
    %1057 = vrot.lane.b32.xlu0 %v990, 48
    %v1058 = vpop.permute.xlu0 %1057
    %1059 = vrot.lane.b32.xlu0 %v991, 48
    %v1060 = vpop.permute.xlu0 %1059
    %1061 = vrot.lane.b32.xlu0 %v992, 48
    %v1062 = vpop.permute.xlu0 %1061
    %1063 = vrot.lane.b32.xlu0 %v993, 48
    %v1064 = vpop.permute.xlu0 %1063
    %1065 = vrot.lane.b32.xlu0 %v994, 48
    %v1066 = vpop.permute.xlu0 %1065
    %1067 = vrot.lane.b32.xlu0 %v995, 48
    %v1068 = vpop.permute.xlu0 %1067
    %1069 = vrot.lane.b32.xlu0 %v996, 48
    %v1070 = vpop.permute.xlu0 %1069
    %1071 = vrot.lane.b32.xlu0 %v997, 48
    %v1072 = vpop.permute.xlu0 %1071
    %1073 = vrot.lane.b32.xlu0 %v998, 48
    %v1074 = vpop.permute.xlu0 %1073
    %1075 = vrot.lane.b32.xlu0 %v999, 48
    %v1076 = vpop.permute.xlu0 %1075
    %1077 = vrot.lane.b32.xlu0 %v1000, 48
    %v1078 = vpop.permute.xlu0 %1077
    %1079 = vrot.lane.b32.xlu0 %v1001, 48
    %v1080 = vpop.permute.xlu0 %1079
    %1081 = vrot.lane.b32.xlu0 %v1002, 48
    %v1082 = vpop.permute.xlu0 %1081
    %1083 = vrot.lane.b32.xlu0 %v1003, 48
    %v1084 = vpop.permute.xlu0 %1083
    %1085 = vrot.lane.b32.xlu0 %v1004, 48
    %v1086 = vpop.permute.xlu0 %1085
    %1087 = vrot.lane.b32.xlu0 %v1005, 48
    %v1088 = vpop.permute.xlu0 %1087
    %1089 = vrot.lane.b32.xlu0 %v1006, 48
    %v1090 = vpop.permute.xlu0 %1089
    %1091 = vrot.lane.b32.xlu0 %v1007, 48
    %v1092 = vpop.permute.xlu0 %1091
    %1093 = vrot.lane.b32.xlu0 %v1008, 48
    %v1094 = vpop.permute.xlu0 %1093
    %1095 = vrot.lane.b32.xlu0 %v1009, 48
    %v1096 = vpop.permute.xlu0 %1095
    %1097 = vrot.lane.b32.xlu0 %v1010, 48
    %v1098 = vpop.permute.xlu0 %1097
    %1099 = vrot.lane.b32.xlu0 %v1011, 48
    %v1100 = vpop.permute.xlu0 %1099
    %1101 = vrot.lane.b32.xlu0 %v1012, 48
    %v1102 = vpop.permute.xlu0 %1101
    %1103 = vrot.lane.b32.xlu0 %v1013, 48
    %v1104 = vpop.permute.xlu0 %1103
    %1105 = vrot.lane.b32.xlu0 %v1014, 48
    %v1106 = vpop.permute.xlu0 %1105
    %1107 = vrot.lane.b32.xlu0 %v1015, 48
    %v1108 = vpop.permute.xlu0 %1107
    %1109 = vrot.lane.b32.xlu0 %v1016, 48
    %v1110 = vpop.permute.xlu0 %1109
    %1111 = vrot.lane.b32.xlu0 %v1017, 48
    %v1112 = vpop.permute.xlu0 %1111
    %1113 = vrot.lane.b32.xlu0 %v1018, 48
    %v1114 = vpop.permute.xlu0 %1113
    %v1147 = vmul.f32 %v924, %v1052
    %v1148 = vmul.f32 %v926, %v1054
    %v1149 = vmul.f32 %v928, %v1056
    %v1150 = vmul.f32 %v930, %v1058
    %v1151 = vmul.f32 %v932, %v1060
    %v1152 = vmul.f32 %v934, %v1062
    %v1153 = vmul.f32 %v936, %v1064
    %v1154 = vmul.f32 %v938, %v1066
    %v1155 = vmul.f32 %v940, %v1068
    %v1156 = vmul.f32 %v942, %v1070
    %v1157 = vmul.f32 %v944, %v1072
    %v1158 = vmul.f32 %v946, %v1074
    %v1159 = vmul.f32 %v948, %v1076
    %v1160 = vmul.f32 %v950, %v1078
    %v1161 = vmul.f32 %v952, %v1080
    %v1162 = vmul.f32 %v954, %v1082
    %v1163 = vmul.f32 %v956, %v1084
    %v1164 = vmul.f32 %v958, %v1086
    %v1165 = vmul.f32 %v960, %v1088
    %v1166 = vmul.f32 %v962, %v1090
    %v1167 = vmul.f32 %v964, %v1092
    %v1168 = vmul.f32 %v966, %v1094
    %v1169 = vmul.f32 %v968, %v1096
    %v1170 = vmul.f32 %v970, %v1098
    %v1171 = vmul.f32 %v972, %v1100
    %v1172 = vmul.f32 %v974, %v1102
    %v1173 = vmul.f32 %v976, %v1104
    %v1174 = vmul.f32 %v978, %v1106
    %v1175 = vmul.f32 %v980, %v1108
    %v1176 = vmul.f32 %v982, %v1110
    %v1177 = vmul.f32 %v984, %v1112
    %v1178 = vmul.f32 %v986, %v1114
    %1211 = vrot.lane.b32.xlu0 %v1147, 112
    %v1212 = vpop.permute.xlu0 %1211
    %1213 = vrot.lane.b32.xlu0 %v1148, 112
    %v1214 = vpop.permute.xlu0 %1213
    %1215 = vrot.lane.b32.xlu0 %v1149, 112
    %v1216 = vpop.permute.xlu0 %1215
    %1217 = vrot.lane.b32.xlu0 %v1150, 112
    %v1218 = vpop.permute.xlu0 %1217
    %1219 = vrot.lane.b32.xlu0 %v1151, 112
    %v1220 = vpop.permute.xlu0 %1219
    %1221 = vrot.lane.b32.xlu0 %v1152, 112
    %v1222 = vpop.permute.xlu0 %1221
    %1223 = vrot.lane.b32.xlu0 %v1153, 112
    %v1224 = vpop.permute.xlu0 %1223
    %1225 = vrot.lane.b32.xlu0 %v1154, 112
    %v1226 = vpop.permute.xlu0 %1225
    %1227 = vrot.lane.b32.xlu0 %v1155, 112
    %v1228 = vpop.permute.xlu0 %1227
    %1229 = vrot.lane.b32.xlu0 %v1156, 112
    %v1230 = vpop.permute.xlu0 %1229
    %1231 = vrot.lane.b32.xlu0 %v1157, 112
    %v1232 = vpop.permute.xlu0 %1231
    %1233 = vrot.lane.b32.xlu0 %v1158, 112
    %v1234 = vpop.permute.xlu0 %1233
    %1235 = vrot.lane.b32.xlu0 %v1159, 112
    %v1236 = vpop.permute.xlu0 %1235
    %1237 = vrot.lane.b32.xlu0 %v1160, 112
    %v1238 = vpop.permute.xlu0 %1237
    %1239 = vrot.lane.b32.xlu0 %v1161, 112
    %v1240 = vpop.permute.xlu0 %1239
    %1241 = vrot.lane.b32.xlu0 %v1162, 112
    %v1242 = vpop.permute.xlu0 %1241
    %1243 = vrot.lane.b32.xlu0 %v1163, 112
    %v1244 = vpop.permute.xlu0 %1243
    %1245 = vrot.lane.b32.xlu0 %v1164, 112
    %v1246 = vpop.permute.xlu0 %1245
    %1247 = vrot.lane.b32.xlu0 %v1165, 112
    %v1248 = vpop.permute.xlu0 %1247
    %1249 = vrot.lane.b32.xlu0 %v1166, 112
    %v1250 = vpop.permute.xlu0 %1249
    %1251 = vrot.lane.b32.xlu0 %v1167, 112
    %v1252 = vpop.permute.xlu0 %1251
    %1253 = vrot.lane.b32.xlu0 %v1168, 112
    %v1254 = vpop.permute.xlu0 %1253
    %1255 = vrot.lane.b32.xlu0 %v1169, 112
    %v1256 = vpop.permute.xlu0 %1255
    %1257 = vrot.lane.b32.xlu0 %v1170, 112
    %v1258 = vpop.permute.xlu0 %1257
    %1259 = vrot.lane.b32.xlu0 %v1171, 112
    %v1260 = vpop.permute.xlu0 %1259
    %1261 = vrot.lane.b32.xlu0 %v1172, 112
    %v1262 = vpop.permute.xlu0 %1261
    %1263 = vrot.lane.b32.xlu0 %v1173, 112
    %v1264 = vpop.permute.xlu0 %1263
    %1265 = vrot.lane.b32.xlu0 %v1174, 112
    %v1266 = vpop.permute.xlu0 %1265
    %1267 = vrot.lane.b32.xlu0 %v1175, 112
    %v1268 = vpop.permute.xlu0 %1267
    %1269 = vrot.lane.b32.xlu0 %v1176, 112
    %v1270 = vpop.permute.xlu0 %1269
    %1271 = vrot.lane.b32.xlu0 %v1177, 112
    %v1272 = vpop.permute.xlu0 %1271
    %1273 = vrot.lane.b32.xlu0 %v1178, 112
    %v1274 = vpop.permute.xlu0 %1273
    %v1307 = vadd.f32 %v765, %v1212
    %v1308 = vadd.f32 %v768, %v1214
    %v1309 = vadd.f32 %v773, %v1216
    %v1310 = vadd.f32 %v776, %v1218
    %v1311 = vadd.f32 %v781, %v1220
    %v1312 = vadd.f32 %v784, %v1222
    %v1313 = vadd.f32 %v789, %v1224
    %v1314 = vadd.f32 %v792, %v1226
    %v1315 = vadd.f32 %v797, %v1228
    %v1316 = vadd.f32 %v800, %v1230
    %v1317 = vadd.f32 %v805, %v1232
    %v1318 = vadd.f32 %v808, %v1234
    %v1319 = vadd.f32 %v813, %v1236
    %v1320 = vadd.f32 %v816, %v1238
    %v1321 = vadd.f32 %v821, %v1240
    %v1322 = vadd.f32 %v824, %v1242
    %v1323 = vadd.f32 %v829, %v1244
    %v1324 = vadd.f32 %v832, %v1246
    %v1325 = vadd.f32 %v837, %v1248
    %v1326 = vadd.f32 %v840, %v1250
    %v1327 = vadd.f32 %v845, %v1252
    %v1328 = vadd.f32 %v848, %v1254
    %v1329 = vadd.f32 %v853, %v1256
    %v1330 = vadd.f32 %v856, %v1258
    %v1331 = vadd.f32 %v861, %v1260
    %v1332 = vadd.f32 %v864, %v1262
    %v1333 = vadd.f32 %v869, %v1264
    %v1334 = vadd.f32 %v872, %v1266
    %v1335 = vadd.f32 %v877, %v1268
    %v1336 = vadd.f32 %v880, %v1270
    %v1337 = vadd.f32 %v885, %v1272
    %v1338 = vadd.f32 %v888, %v1274
    %v1339 = vpack.c.bf16 %v1308, %v1307
    %v1340 = vpack.c.bf16 %v1310, %v1309
    %v1341 = vpack.c.bf16 %v1312, %v1311
    %v1342 = vpack.c.bf16 %v1314, %v1313
    %v1343 = vpack.c.bf16 %v1316, %v1315
    %v1344 = vpack.c.bf16 %v1318, %v1317
    %v1345 = vpack.c.bf16 %v1320, %v1319
    %v1346 = vpack.c.bf16 %v1322, %v1321
    %v1347 = vpack.c.bf16 %v1324, %v1323
    %v1348 = vpack.c.bf16 %v1326, %v1325
    %v1349 = vpack.c.bf16 %v1328, %v1327
    %v1350 = vpack.c.bf16 %v1330, %v1329
    %v1351 = vpack.c.bf16 %v1332, %v1331
    %v1352 = vpack.c.bf16 %v1334, %v1333
    %v1353 = vpack.c.bf16 %v1336, %v1335
    %v1354 = vpack.c.bf16 %v1338, %v1337
    %v1355 = vld [vmem:[%s8] sm:$0xf]
    %v1356 = vld [vmem:[%s8 + $0x4] sm:$0xf]
    %v1357 = vld [vmem:[%s9] sm:$0x1]
    %v1359 = vlaneseq
    %v1360 = vshrl.u32 %v1359, 7
    %v1361 = vsub.s32 0, %v1360
    %v1362 = vrot.slane %v1357, %v1361
    %1380 = vrot.lane.b32.xlu0 %v1339, 96
    %v1381 = vpop.permute.xlu0 %1380
    %1382 = vrot.lane.b32.xlu0 %v1340, 96
    %v1383 = vpop.permute.xlu0 %1382
    %1384 = vrot.lane.b32.xlu0 %v1341, 96
    %v1385 = vpop.permute.xlu0 %1384
    %1386 = vrot.lane.b32.xlu0 %v1342, 96
    %v1387 = vpop.permute.xlu0 %1386
    %1388 = vrot.lane.b32.xlu0 %v1343, 96
    %v1389 = vpop.permute.xlu0 %1388
    %1390 = vrot.lane.b32.xlu0 %v1344, 96
    %v1391 = vpop.permute.xlu0 %1390
    %1392 = vrot.lane.b32.xlu0 %v1345, 96
    %v1393 = vpop.permute.xlu0 %1392
    %1394 = vrot.lane.b32.xlu0 %v1346, 96
    %v1395 = vpop.permute.xlu0 %1394
    %1396 = vrot.lane.b32.xlu0 %v1347, 96
    %v1397 = vpop.permute.xlu0 %1396
    %1398 = vrot.lane.b32.xlu0 %v1348, 96
    %v1399 = vpop.permute.xlu0 %1398
    %1400 = vrot.lane.b32.xlu0 %v1349, 96
    %v1401 = vpop.permute.xlu0 %1400
    %1402 = vrot.lane.b32.xlu0 %v1350, 96
    %v1403 = vpop.permute.xlu0 %1402
    %1404 = vrot.lane.b32.xlu0 %v1351, 96
    %v1405 = vpop.permute.xlu0 %1404
    %1406 = vrot.lane.b32.xlu0 %v1352, 96
    %v1407 = vpop.permute.xlu0 %1406
    %1408 = vrot.lane.b32.xlu0 %v1353, 96
    %v1409 = vpop.permute.xlu0 %1408
    %1410 = vrot.lane.b32.xlu0 %v1354, 96
    %v1411 = vpop.permute.xlu0 %1410
    %v1414 = vunpack.c.l.b16 %v1355
    %v1415 = vunpack.c.l.b16 %v1356
    %v1416 = vpack.c.b16 %v1415, %v1414
    %vm1418 = vcmask 130048
    %v1420 = vsel %vm1418, %v1381, 0
    %v1423 = vsel %vm1418, %v1383, 0
    %v1426 = vsel %vm1418, %v1385, 0
    %v1429 = vsel %vm1418, %v1387, 0
    %v1432 = vsel %vm1418, %v1389, 0
    %v1435 = vsel %vm1418, %v1391, 0
    %v1438 = vsel %vm1418, %v1393, 0
    %v1441 = vsel %vm1418, %v1395, 0
    %v1444 = vsel %vm1418, %v1397, 0
    %v1447 = vsel %vm1418, %v1399, 0
    %v1450 = vsel %vm1418, %v1401, 0
    %v1453 = vsel %vm1418, %v1403, 0
    %v1456 = vsel %vm1418, %v1405, 0
    %v1459 = vsel %vm1418, %v1407, 0
    %v1462 = vsel %vm1418, %v1409, 0
    %v1465 = vsel %vm1418, %v1411, 0
    %1467 = vmatprep.subr.bf16.mxu0 0
    %1468 = vmatpush1.bf16.msra.mxu0 0
    %1469 = vmatprep.subr.bf16.mxu0 0
    %1470 = vmatpush1.bf16.msra.mxu0 0
    %1471 = vmatprep.subr.bf16.mxu0 0
    %1472 = vmatpush1.bf16.msra.mxu0 0
    %1473 = vmatprep.subr.bf16.mxu0 0
    %1474 = vmatpush1.bf16.msra.mxu0 0
    %1475 = vmatprep.subr.bf16.mxu0 0
    %1476 = vmatpush1.bf16.msra.mxu0 0
    %1477 = vmatprep.subr.bf16.mxu0 0
    %1478 = vmatpush1.bf16.msra.mxu0 0
    %1479 = vmatprep.subr.bf16.mxu0 0
    %1480 = vmatpush1.bf16.msra.mxu0 0
    %1481 = vmatprep.subr.bf16.mxu0 0
    %1482 = vmatpush1.bf16.msra.mxu0 %v1416
    %1483 = vmatprep.subr.bf16.mxu0 0
    %1484 = vmatpush2.bf16.msra.mxu0 0
    %1485 = vmatprep.subr.bf16.mxu0 0
    %1486 = vmatpush2.bf16.msra.mxu0 0
    %1487 = vmatprep.subr.bf16.mxu0 0
    %1488 = vmatpush2.bf16.msra.mxu0 0
    %1489 = vmatprep.subr.bf16.mxu0 0
    %1490 = vmatpush2.bf16.msra.mxu0 0
    %1491 = vmatprep.subr.bf16.mxu0 0
    %1492 = vmatpush2.bf16.msra.mxu0 0
    %1493 = vmatprep.subr.bf16.mxu0 0
    %1494 = vmatpush2.bf16.msra.mxu0 0
    %1495 = vmatprep.subr.bf16.mxu0 0
    %1496 = vmatpush2.bf16.msra.mxu0 0
    %1497 = vmatprep.subr.bf16.mxu0 0
    %1498 = vmatpush2.bf16.msra.mxu0 0
    %1499 = vmatprep.mubr.bf16.mxu0 0
    %1500 = vmatmul.mubr.bf16.gmra.mxu0 %v1420
    %v1501 = vpop.f32.mrf.mxu0
    %v1502 = vadd.f32 %v1362, %v1501
    %v1503 = vpop.f32.mrf.mxu0
    %v1504 = vpop.f32.mrf.mxu0
    %v1505 = vadd.f32 %v1362, %v1504
    %v1506 = vpop.f32.mrf.mxu0
    %1507 = vmatprep.mubr.bf16.mxu0 0
    %1508 = vmatmul.mubr.bf16.gmra.mxu0 %v1423
    %v1509 = vpop.f32.mrf.mxu0
    %v1510 = vadd.f32 %v1362, %v1509
    %v1511 = vpop.f32.mrf.mxu0
    %v1512 = vpop.f32.mrf.mxu0
    %v1513 = vadd.f32 %v1362, %v1512
    %v1514 = vpop.f32.mrf.mxu0
    %1515 = vmatprep.mubr.bf16.mxu0 0
    %1516 = vmatmul.mubr.bf16.gmra.mxu0 %v1426
    %v1517 = vpop.f32.mrf.mxu0
    %v1518 = vadd.f32 %v1362, %v1517
    %v1519 = vpop.f32.mrf.mxu0
    %v1520 = vpop.f32.mrf.mxu0
    %v1521 = vadd.f32 %v1362, %v1520
    %v1522 = vpop.f32.mrf.mxu0
    %1523 = vmatprep.mubr.bf16.mxu0 0
    %1524 = vmatmul.mubr.bf16.gmra.mxu0 %v1429
    %v1525 = vpop.f32.mrf.mxu0
    %v1526 = vadd.f32 %v1362, %v1525
    %v1527 = vpop.f32.mrf.mxu0
    %v1528 = vpop.f32.mrf.mxu0
    %v1529 = vadd.f32 %v1362, %v1528
    %v1530 = vpop.f32.mrf.mxu0
    %1531 = vmatprep.mubr.bf16.mxu0 0
    %1532 = vmatmul.mubr.bf16.gmra.mxu0 %v1432
    %v1533 = vpop.f32.mrf.mxu0
    %v1534 = vadd.f32 %v1362, %v1533
    %v1535 = vpop.f32.mrf.mxu0
    %v1536 = vpop.f32.mrf.mxu0
    %v1537 = vadd.f32 %v1362, %v1536
    %v1538 = vpop.f32.mrf.mxu0
    %1539 = vmatprep.mubr.bf16.mxu0 0
    %1540 = vmatmul.mubr.bf16.gmra.mxu0 %v1435
    %v1541 = vpop.f32.mrf.mxu0
    %v1542 = vadd.f32 %v1362, %v1541
    %v1543 = vpop.f32.mrf.mxu0
    %v1544 = vpop.f32.mrf.mxu0
    %v1545 = vadd.f32 %v1362, %v1544
    %v1546 = vpop.f32.mrf.mxu0
    %1547 = vmatprep.mubr.bf16.mxu0 0
    %1548 = vmatmul.mubr.bf16.gmra.mxu0 %v1438
    %v1549 = vpop.f32.mrf.mxu0
    %v1550 = vadd.f32 %v1362, %v1549
    %v1551 = vpop.f32.mrf.mxu0
    %v1552 = vpop.f32.mrf.mxu0
    %v1553 = vadd.f32 %v1362, %v1552
    %v1554 = vpop.f32.mrf.mxu0
    %1555 = vmatprep.mubr.bf16.mxu0 0
    %1556 = vmatmul.mubr.bf16.gmra.mxu0 %v1441
    %v1557 = vpop.f32.mrf.mxu0
    %v1558 = vadd.f32 %v1362, %v1557
    %v1559 = vpop.f32.mrf.mxu0
    %v1560 = vpop.f32.mrf.mxu0
    %v1561 = vadd.f32 %v1362, %v1560
    %v1562 = vpop.f32.mrf.mxu0
    %1563 = vmatprep.mubr.bf16.mxu0 0
    %1564 = vmatmul.mubr.bf16.gmra.mxu0 %v1444
    %v1565 = vpop.f32.mrf.mxu0
    %v1566 = vadd.f32 %v1362, %v1565
    %v1567 = vpop.f32.mrf.mxu0
    %v1568 = vpop.f32.mrf.mxu0
    %v1569 = vadd.f32 %v1362, %v1568
    %v1570 = vpop.f32.mrf.mxu0
    %1571 = vmatprep.mubr.bf16.mxu0 0
    %1572 = vmatmul.mubr.bf16.gmra.mxu0 %v1447
    %v1573 = vpop.f32.mrf.mxu0
    %v1574 = vadd.f32 %v1362, %v1573
    %v1575 = vpop.f32.mrf.mxu0
    %v1576 = vpop.f32.mrf.mxu0
    %v1577 = vadd.f32 %v1362, %v1576
    %v1578 = vpop.f32.mrf.mxu0
    %1579 = vmatprep.mubr.bf16.mxu0 0
    %1580 = vmatmul.mubr.bf16.gmra.mxu0 %v1450
    %v1581 = vpop.f32.mrf.mxu0
    %v1582 = vadd.f32 %v1362, %v1581
    %v1583 = vpop.f32.mrf.mxu0
    %v1584 = vpop.f32.mrf.mxu0
    %v1585 = vadd.f32 %v1362, %v1584
    %v1586 = vpop.f32.mrf.mxu0
    %1587 = vmatprep.mubr.bf16.mxu0 0
    %1588 = vmatmul.mubr.bf16.gmra.mxu0 %v1453
    %v1589 = vpop.f32.mrf.mxu0
    %v1590 = vadd.f32 %v1362, %v1589
    %v1591 = vpop.f32.mrf.mxu0
    %v1592 = vpop.f32.mrf.mxu0
    %v1593 = vadd.f32 %v1362, %v1592
    %v1594 = vpop.f32.mrf.mxu0
    %1595 = vmatprep.mubr.bf16.mxu0 0
    %1596 = vmatmul.mubr.bf16.gmra.mxu0 %v1456
    %v1597 = vpop.f32.mrf.mxu0
    %v1598 = vadd.f32 %v1362, %v1597
    %v1599 = vpop.f32.mrf.mxu0
    %v1600 = vpop.f32.mrf.mxu0
    %v1601 = vadd.f32 %v1362, %v1600
    %v1602 = vpop.f32.mrf.mxu0
    %1603 = vmatprep.mubr.bf16.mxu0 0
    %1604 = vmatmul.mubr.bf16.gmra.mxu0 %v1459
    %v1605 = vpop.f32.mrf.mxu0
    %v1606 = vadd.f32 %v1362, %v1605
    %v1607 = vpop.f32.mrf.mxu0
    %v1608 = vpop.f32.mrf.mxu0
    %v1609 = vadd.f32 %v1362, %v1608
    %v1610 = vpop.f32.mrf.mxu0
    %1611 = vmatprep.mubr.bf16.mxu0 0
    %1612 = vmatmul.mubr.bf16.gmra.mxu0 %v1462
    %v1613 = vpop.f32.mrf.mxu0
    %v1614 = vadd.f32 %v1362, %v1613
    %v1615 = vpop.f32.mrf.mxu0
    %v1616 = vpop.f32.mrf.mxu0
    %v1617 = vadd.f32 %v1362, %v1616
    %v1618 = vpop.f32.mrf.mxu0
    %1619 = vmatprep.mubr.bf16.mxu0 0
    %1620 = vmatmul.mubr.bf16.gmra.mxu0 %v1465
    %v1621 = vpop.f32.mrf.mxu0
    %v1622 = vadd.f32 %v1362, %v1621
    %v1623 = vpop.f32.mrf.mxu0
    %v1624 = vpop.f32.mrf.mxu0
    %v1625 = vadd.f32 %v1362, %v1624
    %v1626 = vpop.f32.mrf.mxu0
    %1627 = vdwg.mxu0
    %v1628 = vmax.f32 %v1502, 0.0
    %v1629 = vmax.f32 %v1505, 0.0
    %v1630 = vmax.f32 %v1510, 0.0
    %v1631 = vmax.f32 %v1513, 0.0
    %v1632 = vmax.f32 %v1518, 0.0
    %v1633 = vmax.f32 %v1521, 0.0
    %v1634 = vmax.f32 %v1526, 0.0
    %v1635 = vmax.f32 %v1529, 0.0
    %v1636 = vmax.f32 %v1534, 0.0
    %v1637 = vmax.f32 %v1537, 0.0
    %v1638 = vmax.f32 %v1542, 0.0
    %v1639 = vmax.f32 %v1545, 0.0
    %v1640 = vmax.f32 %v1550, 0.0
    %v1641 = vmax.f32 %v1553, 0.0
    %v1642 = vmax.f32 %v1558, 0.0
    %v1643 = vmax.f32 %v1561, 0.0
    %v1644 = vmax.f32 %v1566, 0.0
    %v1645 = vmax.f32 %v1569, 0.0
    %v1646 = vmax.f32 %v1574, 0.0
    %v1647 = vmax.f32 %v1577, 0.0
    %v1648 = vmax.f32 %v1582, 0.0
    %v1649 = vmax.f32 %v1585, 0.0
    %v1650 = vmax.f32 %v1590, 0.0
    %v1651 = vmax.f32 %v1593, 0.0
    %v1652 = vmax.f32 %v1598, 0.0
    %v1653 = vmax.f32 %v1601, 0.0
    %v1654 = vmax.f32 %v1606, 0.0
    %v1655 = vmax.f32 %v1609, 0.0
    %v1656 = vmax.f32 %v1614, 0.0
    %v1657 = vmax.f32 %v1617, 0.0
    %v1658 = vmax.f32 %v1622, 0.0
    %v1659 = vmax.f32 %v1625, 0.0
    %v1660 = vpack.c.bf16 %v1629, %v1628
    %v1661 = vpack.c.bf16 %v1631, %v1630
    %v1662 = vpack.c.bf16 %v1633, %v1632
    %v1663 = vpack.c.bf16 %v1635, %v1634
    %v1664 = vpack.c.bf16 %v1637, %v1636
    %v1665 = vpack.c.bf16 %v1639, %v1638
    %v1666 = vpack.c.bf16 %v1641, %v1640
    %v1667 = vpack.c.bf16 %v1643, %v1642
    %v1668 = vpack.c.bf16 %v1645, %v1644
    %v1669 = vpack.c.bf16 %v1647, %v1646
    %v1670 = vpack.c.bf16 %v1649, %v1648
    %v1671 = vpack.c.bf16 %v1651, %v1650
    %v1672 = vpack.c.bf16 %v1653, %v1652
    %v1673 = vpack.c.bf16 %v1655, %v1654
    %v1674 = vpack.c.bf16 %v1657, %v1656
    %v1675 = vpack.c.bf16 %v1659, %v1658
    %v1676 = vld [vmem:[%s10] sm:$0xf]
    %v1677 = vld [vmem:[%s10 + $0x4] sm:$0xf]
    %v1678 = vld [vmem:[%s10 + $0x8] sm:$0xf]
    %v1679 = vld [vmem:[%s10 + $0xc] sm:$0xf]
    %v1680 = vld [vmem:[%s11] sm:$0x1]
    %v1682 = vlaneseq
    %v1683 = vshrl.u32 %v1682, 7
    %v1684 = vsub.s32 0, %v1683
    %v1685 = vrot.slane %v1680, %v1684
    %v1691 = vunpack.c.l.b16 %v1676
    %v1692 = vunpack.c.l.b16 %v1677
    %v1693 = vunpack.c.l.b16 %v1678
    %v1694 = vunpack.c.l.b16 %v1679
    %v1695 = vpack.c.b16 %v1692, %v1691
    %v1696 = vpack.c.b16 %v1694, %v1693
    %v1700 = vsel %vm121, %v1660, 0
    %v1703 = vsel %vm121, %v1661, 0
    %v1706 = vsel %vm121, %v1662, 0
    %v1709 = vsel %vm121, %v1663, 0
    %v1712 = vsel %vm121, %v1664, 0
    %v1715 = vsel %vm121, %v1665, 0
    %v1718 = vsel %vm121, %v1666, 0
    %v1721 = vsel %vm121, %v1667, 0
    %v1724 = vsel %vm121, %v1668, 0
    %v1727 = vsel %vm121, %v1669, 0
    %v1730 = vsel %vm121, %v1670, 0
    %v1733 = vsel %vm121, %v1671, 0
    %v1736 = vsel %vm121, %v1672, 0
    %v1739 = vsel %vm121, %v1673, 0
    %v1742 = vsel %vm121, %v1674, 0
    %v1745 = vsel %vm121, %v1675, 0
    %1747 = vmatprep.subr.bf16.mxu0 0
    %1748 = vmatpush1.bf16.msra.mxu0 0
    %1749 = vmatprep.subr.bf16.mxu0 0
    %1750 = vmatpush1.bf16.msra.mxu0 0
    %1751 = vmatprep.subr.bf16.mxu0 0
    %1752 = vmatpush1.bf16.msra.mxu0 0
    %1753 = vmatprep.subr.bf16.mxu0 0
    %1754 = vmatpush1.bf16.msra.mxu0 0
    %1755 = vmatprep.subr.bf16.mxu0 0
    %1756 = vmatpush1.bf16.msra.mxu0 0
    %1757 = vmatprep.subr.bf16.mxu0 0
    %1758 = vmatpush1.bf16.msra.mxu0 0
    %1759 = vmatprep.subr.bf16.mxu0 0
    %1760 = vmatpush1.bf16.msra.mxu0 %v1696
    %1761 = vmatprep.subr.bf16.mxu0 0
    %1762 = vmatpush1.bf16.msra.mxu0 %v1695
    %1763 = vmatprep.subr.bf16.mxu0 0
    %1764 = vmatpush2.bf16.msra.mxu0 0
    %1765 = vmatprep.subr.bf16.mxu0 0
    %1766 = vmatpush2.bf16.msra.mxu0 0
    %1767 = vmatprep.subr.bf16.mxu0 0
    %1768 = vmatpush2.bf16.msra.mxu0 0
    %1769 = vmatprep.subr.bf16.mxu0 0
    %1770 = vmatpush2.bf16.msra.mxu0 0
    %1771 = vmatprep.subr.bf16.mxu0 0
    %1772 = vmatpush2.bf16.msra.mxu0 0
    %1773 = vmatprep.subr.bf16.mxu0 0
    %1774 = vmatpush2.bf16.msra.mxu0 0
    %1775 = vmatprep.subr.bf16.mxu0 0
    %1776 = vmatpush2.bf16.msra.mxu0 0
    %1777 = vmatprep.subr.bf16.mxu0 0
    %1778 = vmatpush2.bf16.msra.mxu0 0
    %1779 = vmatprep.mubr.bf16.mxu0 0
    %1780 = vmatmul.mubr.bf16.gmra.mxu0 %v1700
    %v1781 = vpop.f32.mrf.mxu0
    %v1782 = vadd.f32 %v1685, %v1781
    %v1783 = vpop.f32.mrf.mxu0
    %v1784 = vpop.f32.mrf.mxu0
    %v1785 = vadd.f32 %v1685, %v1784
    %v1786 = vpop.f32.mrf.mxu0
    %1787 = vmatprep.mubr.bf16.mxu0 0
    %1788 = vmatmul.mubr.bf16.gmra.mxu0 %v1703
    %v1789 = vpop.f32.mrf.mxu0
    %v1790 = vadd.f32 %v1685, %v1789
    %v1791 = vpop.f32.mrf.mxu0
    %v1792 = vpop.f32.mrf.mxu0
    %v1793 = vadd.f32 %v1685, %v1792
    %v1794 = vpop.f32.mrf.mxu0
    %1795 = vmatprep.mubr.bf16.mxu0 0
    %1796 = vmatmul.mubr.bf16.gmra.mxu0 %v1706
    %v1797 = vpop.f32.mrf.mxu0
    %v1798 = vadd.f32 %v1685, %v1797
    %v1799 = vpop.f32.mrf.mxu0
    %v1800 = vpop.f32.mrf.mxu0
    %v1801 = vadd.f32 %v1685, %v1800
    %v1802 = vpop.f32.mrf.mxu0
    %1803 = vmatprep.mubr.bf16.mxu0 0
    %1804 = vmatmul.mubr.bf16.gmra.mxu0 %v1709
    %v1805 = vpop.f32.mrf.mxu0
    %v1806 = vadd.f32 %v1685, %v1805
    %v1807 = vpop.f32.mrf.mxu0
    %v1808 = vpop.f32.mrf.mxu0
    %v1809 = vadd.f32 %v1685, %v1808
    %v1810 = vpop.f32.mrf.mxu0
    %1811 = vmatprep.mubr.bf16.mxu0 0
    %1812 = vmatmul.mubr.bf16.gmra.mxu0 %v1712
    %v1813 = vpop.f32.mrf.mxu0
    %v1814 = vadd.f32 %v1685, %v1813
    %v1815 = vpop.f32.mrf.mxu0
    %v1816 = vpop.f32.mrf.mxu0
    %v1817 = vadd.f32 %v1685, %v1816
    %v1818 = vpop.f32.mrf.mxu0
    %1819 = vmatprep.mubr.bf16.mxu0 0
    %1820 = vmatmul.mubr.bf16.gmra.mxu0 %v1715
    %v1821 = vpop.f32.mrf.mxu0
    %v1822 = vadd.f32 %v1685, %v1821
    %v1823 = vpop.f32.mrf.mxu0
    %v1824 = vpop.f32.mrf.mxu0
    %v1825 = vadd.f32 %v1685, %v1824
    %v1826 = vpop.f32.mrf.mxu0
    %1827 = vmatprep.mubr.bf16.mxu0 0
    %1828 = vmatmul.mubr.bf16.gmra.mxu0 %v1718
    %v1829 = vpop.f32.mrf.mxu0
    %v1830 = vadd.f32 %v1685, %v1829
    %v1831 = vpop.f32.mrf.mxu0
    %v1832 = vpop.f32.mrf.mxu0
    %v1833 = vadd.f32 %v1685, %v1832
    %v1834 = vpop.f32.mrf.mxu0
    %1835 = vmatprep.mubr.bf16.mxu0 0
    %1836 = vmatmul.mubr.bf16.gmra.mxu0 %v1721
    %v1837 = vpop.f32.mrf.mxu0
    %v1838 = vadd.f32 %v1685, %v1837
    %v1839 = vpop.f32.mrf.mxu0
    %v1840 = vpop.f32.mrf.mxu0
    %v1841 = vadd.f32 %v1685, %v1840
    %v1842 = vpop.f32.mrf.mxu0
    %1843 = vmatprep.mubr.bf16.mxu0 0
    %1844 = vmatmul.mubr.bf16.gmra.mxu0 %v1724
    %v1845 = vpop.f32.mrf.mxu0
    %v1846 = vadd.f32 %v1685, %v1845
    %v1847 = vpop.f32.mrf.mxu0
    %v1848 = vpop.f32.mrf.mxu0
    %v1849 = vadd.f32 %v1685, %v1848
    %v1850 = vpop.f32.mrf.mxu0
    %1851 = vmatprep.mubr.bf16.mxu0 0
    %1852 = vmatmul.mubr.bf16.gmra.mxu0 %v1727
    %v1853 = vpop.f32.mrf.mxu0
    %v1854 = vadd.f32 %v1685, %v1853
    %v1855 = vpop.f32.mrf.mxu0
    %v1856 = vpop.f32.mrf.mxu0
    %v1857 = vadd.f32 %v1685, %v1856
    %v1858 = vpop.f32.mrf.mxu0
    %1859 = vmatprep.mubr.bf16.mxu0 0
    %1860 = vmatmul.mubr.bf16.gmra.mxu0 %v1730
    %v1861 = vpop.f32.mrf.mxu0
    %v1862 = vadd.f32 %v1685, %v1861
    %v1863 = vpop.f32.mrf.mxu0
    %v1864 = vpop.f32.mrf.mxu0
    %v1865 = vadd.f32 %v1685, %v1864
    %v1866 = vpop.f32.mrf.mxu0
    %1867 = vmatprep.mubr.bf16.mxu0 0
    %1868 = vmatmul.mubr.bf16.gmra.mxu0 %v1733
    %v1869 = vpop.f32.mrf.mxu0
    %v1870 = vadd.f32 %v1685, %v1869
    %v1871 = vpop.f32.mrf.mxu0
    %v1872 = vpop.f32.mrf.mxu0
    %v1873 = vadd.f32 %v1685, %v1872
    %v1874 = vpop.f32.mrf.mxu0
    %1875 = vmatprep.mubr.bf16.mxu0 0
    %1876 = vmatmul.mubr.bf16.gmra.mxu0 %v1736
    %v1877 = vpop.f32.mrf.mxu0
    %v1878 = vadd.f32 %v1685, %v1877
    %v1879 = vpop.f32.mrf.mxu0
    %v1880 = vpop.f32.mrf.mxu0
    %v1881 = vadd.f32 %v1685, %v1880
    %v1882 = vpop.f32.mrf.mxu0
    %1883 = vmatprep.mubr.bf16.mxu0 0
    %1884 = vmatmul.mubr.bf16.gmra.mxu0 %v1739
    %v1885 = vpop.f32.mrf.mxu0
    %v1886 = vadd.f32 %v1685, %v1885
    %v1887 = vpop.f32.mrf.mxu0
    %v1888 = vpop.f32.mrf.mxu0
    %v1889 = vadd.f32 %v1685, %v1888
    %v1890 = vpop.f32.mrf.mxu0
    %1891 = vmatprep.mubr.bf16.mxu0 0
    %1892 = vmatmul.mubr.bf16.gmra.mxu0 %v1742
    %v1893 = vpop.f32.mrf.mxu0
    %v1894 = vadd.f32 %v1685, %v1893
    %v1895 = vpop.f32.mrf.mxu0
    %v1896 = vpop.f32.mrf.mxu0
    %v1897 = vadd.f32 %v1685, %v1896
    %v1898 = vpop.f32.mrf.mxu0
    %1899 = vmatprep.mubr.bf16.mxu0 0
    %1900 = vmatmul.mubr.bf16.gmra.mxu0 %v1745
    %v1901 = vpop.f32.mrf.mxu0
    %v1902 = vadd.f32 %v1685, %v1901
    %v1903 = vpop.f32.mrf.mxu0
    %v1904 = vpop.f32.mrf.mxu0
    %v1905 = vadd.f32 %v1685, %v1904
    %v1906 = vpop.f32.mrf.mxu0
    %1907 = vdwg.mxu0
    %v1908 = vxor.u32 %v1782, 2147483648
    %v1909 = vxor.u32 %v1785, 2147483648
    %v1910 = vxor.u32 %v1790, 2147483648
    %v1911 = vxor.u32 %v1793, 2147483648
    %v1912 = vxor.u32 %v1798, 2147483648
    %v1913 = vxor.u32 %v1801, 2147483648
    %v1914 = vxor.u32 %v1806, 2147483648
    %v1915 = vxor.u32 %v1809, 2147483648
    %v1916 = vxor.u32 %v1814, 2147483648
    %v1917 = vxor.u32 %v1817, 2147483648
    %v1918 = vxor.u32 %v1822, 2147483648
    %v1919 = vxor.u32 %v1825, 2147483648
    %v1920 = vxor.u32 %v1830, 2147483648
    %v1921 = vxor.u32 %v1833, 2147483648
    %v1922 = vxor.u32 %v1838, 2147483648
    %v1923 = vxor.u32 %v1841, 2147483648
    %v1924 = vxor.u32 %v1846, 2147483648
    %v1925 = vxor.u32 %v1849, 2147483648
    %v1926 = vxor.u32 %v1854, 2147483648
    %v1927 = vxor.u32 %v1857, 2147483648
    %v1928 = vxor.u32 %v1862, 2147483648
    %v1929 = vxor.u32 %v1865, 2147483648
    %v1930 = vxor.u32 %v1870, 2147483648
    %v1931 = vxor.u32 %v1873, 2147483648
    %v1932 = vxor.u32 %v1878, 2147483648
    %v1933 = vxor.u32 %v1881, 2147483648
    %v1934 = vxor.u32 %v1886, 2147483648
    %v1935 = vxor.u32 %v1889, 2147483648
    %v1936 = vxor.u32 %v1894, 2147483648
    %v1937 = vxor.u32 %v1897, 2147483648
    %v1938 = vxor.u32 %v1902, 2147483648
    %v1939 = vxor.u32 %v1905, 2147483648
    %v1940 = vmul.f32 %v1908, 1.442695
    %v1941 = vpow.pop %v1940
    %v1942 = vmul.f32 %v1909, 1.442695
    %v1943 = vpow.pop %v1942
    %v1944 = vmul.f32 %v1910, 1.442695
    %v1945 = vpow.pop %v1944
    %v1946 = vmul.f32 %v1911, 1.442695
    %v1947 = vpow.pop %v1946
    %v1948 = vmul.f32 %v1912, 1.442695
    %v1949 = vpow.pop %v1948
    %v1950 = vmul.f32 %v1913, 1.442695
    %v1951 = vpow.pop %v1950
    %v1952 = vmul.f32 %v1914, 1.442695
    %v1953 = vpow.pop %v1952
    %v1954 = vmul.f32 %v1915, 1.442695
    %v1955 = vpow.pop %v1954
    %v1956 = vmul.f32 %v1916, 1.442695
    %v1957 = vpow.pop %v1956
    %v1958 = vmul.f32 %v1917, 1.442695
    %v1959 = vpow.pop %v1958
    %v1960 = vmul.f32 %v1918, 1.442695
    %v1961 = vpow.pop %v1960
    %v1962 = vmul.f32 %v1919, 1.442695
    %v1963 = vpow.pop %v1962
    %v1964 = vmul.f32 %v1920, 1.442695
    %v1965 = vpow.pop %v1964
    %v1966 = vmul.f32 %v1921, 1.442695
    %v1967 = vpow.pop %v1966
    %v1968 = vmul.f32 %v1922, 1.442695
    %v1969 = vpow.pop %v1968
    %v1970 = vmul.f32 %v1923, 1.442695
    %v1971 = vpow.pop %v1970
    %v1972 = vmul.f32 %v1924, 1.442695
    %v1973 = vpow.pop %v1972
    %v1974 = vmul.f32 %v1925, 1.442695
    %v1975 = vpow.pop %v1974
    %v1976 = vmul.f32 %v1926, 1.442695
    %v1977 = vpow.pop %v1976
    %v1978 = vmul.f32 %v1927, 1.442695
    %v1979 = vpow.pop %v1978
    %v1980 = vmul.f32 %v1928, 1.442695
    %v1981 = vpow.pop %v1980
    %v1982 = vmul.f32 %v1929, 1.442695
    %v1983 = vpow.pop %v1982
    %v1984 = vmul.f32 %v1930, 1.442695
    %v1985 = vpow.pop %v1984
    %v1986 = vmul.f32 %v1931, 1.442695
    %v1987 = vpow.pop %v1986
    %v1988 = vmul.f32 %v1932, 1.442695
    %v1989 = vpow.pop %v1988
    %v1990 = vmul.f32 %v1933, 1.442695
    %v1991 = vpow.pop %v1990
    %v1992 = vmul.f32 %v1934, 1.442695
    %v1993 = vpow.pop %v1992
    %v1994 = vmul.f32 %v1935, 1.442695
    %v1995 = vpow.pop %v1994
    %v1996 = vmul.f32 %v1936, 1.442695
    %v1997 = vpow.pop %v1996
    %v1998 = vmul.f32 %v1937, 1.442695
    %v1999 = vpow.pop %v1998
    %v2000 = vmul.f32 %v1938, 1.442695
    %v2001 = vpow.pop %v2000
    %v2002 = vmul.f32 %v1939, 1.442695
    %v2003 = vpow.pop %v2002
    %v2004 = vadd.f32 %v1941, 1.0
    %v2005 = vadd.f32 %v1943, 1.0
    %v2006 = vadd.f32 %v1945, 1.0
    %v2007 = vadd.f32 %v1947, 1.0
    %v2008 = vadd.f32 %v1949, 1.0
    %v2009 = vadd.f32 %v1951, 1.0
    %v2010 = vadd.f32 %v1953, 1.0
    %v2011 = vadd.f32 %v1955, 1.0
    %v2012 = vadd.f32 %v1957, 1.0
    %v2013 = vadd.f32 %v1959, 1.0
    %v2014 = vadd.f32 %v1961, 1.0
    %v2015 = vadd.f32 %v1963, 1.0
    %v2016 = vadd.f32 %v1965, 1.0
    %v2017 = vadd.f32 %v1967, 1.0
    %v2018 = vadd.f32 %v1969, 1.0
    %v2019 = vadd.f32 %v1971, 1.0
    %v2020 = vadd.f32 %v1973, 1.0
    %v2021 = vadd.f32 %v1975, 1.0
    %v2022 = vadd.f32 %v1977, 1.0
    %v2023 = vadd.f32 %v1979, 1.0
    %v2024 = vadd.f32 %v1981, 1.0
    %v2025 = vadd.f32 %v1983, 1.0
    %v2026 = vadd.f32 %v1985, 1.0
    %v2027 = vadd.f32 %v1987, 1.0
    %v2028 = vadd.f32 %v1989, 1.0
    %v2029 = vadd.f32 %v1991, 1.0
    %v2030 = vadd.f32 %v1993, 1.0
    %v2031 = vadd.f32 %v1995, 1.0
    %v2032 = vadd.f32 %v1997, 1.0
    %v2033 = vadd.f32 %v1999, 1.0
    %v2034 = vadd.f32 %v2001, 1.0
    %v2035 = vadd.f32 %v2003, 1.0
    %v2036 = vrcp.pop %v2004
    %v2037 = vmul.f32 1.0, %v2036
    %v2038 = vrcp.pop %v2005
    %v2039 = vmul.f32 1.0, %v2038
    %v2040 = vrcp.pop %v2006
    %v2041 = vmul.f32 1.0, %v2040
    %v2042 = vrcp.pop %v2007
    %v2043 = vmul.f32 1.0, %v2042
    %v2044 = vrcp.pop %v2008
    %v2045 = vmul.f32 1.0, %v2044
    %v2046 = vrcp.pop %v2009
    %v2047 = vmul.f32 1.0, %v2046
    %v2048 = vrcp.pop %v2010
    %v2049 = vmul.f32 1.0, %v2048
    %v2050 = vrcp.pop %v2011
    %v2051 = vmul.f32 1.0, %v2050
    %v2052 = vrcp.pop %v2012
    %v2053 = vmul.f32 1.0, %v2052
    %v2054 = vrcp.pop %v2013
    %v2055 = vmul.f32 1.0, %v2054
    %v2056 = vrcp.pop %v2014
    %v2057 = vmul.f32 1.0, %v2056
    %v2058 = vrcp.pop %v2015
    %v2059 = vmul.f32 1.0, %v2058
    %v2060 = vrcp.pop %v2016
    %v2061 = vmul.f32 1.0, %v2060
    %v2062 = vrcp.pop %v2017
    %v2063 = vmul.f32 1.0, %v2062
    %v2064 = vrcp.pop %v2018
    %v2065 = vmul.f32 1.0, %v2064
    %v2066 = vrcp.pop %v2019
    %v2067 = vmul.f32 1.0, %v2066
    %v2068 = vrcp.pop %v2020
    %v2069 = vmul.f32 1.0, %v2068
    %v2070 = vrcp.pop %v2021
    %v2071 = vmul.f32 1.0, %v2070
    %v2072 = vrcp.pop %v2022
    %v2073 = vmul.f32 1.0, %v2072
    %v2074 = vrcp.pop %v2023
    %v2075 = vmul.f32 1.0, %v2074
    %v2076 = vrcp.pop %v2024
    %v2077 = vmul.f32 1.0, %v2076
    %v2078 = vrcp.pop %v2025
    %v2079 = vmul.f32 1.0, %v2078
    %v2080 = vrcp.pop %v2026
    %v2081 = vmul.f32 1.0, %v2080
    %v2082 = vrcp.pop %v2027
    %v2083 = vmul.f32 1.0, %v2082
    %v2084 = vrcp.pop %v2028
    %v2085 = vmul.f32 1.0, %v2084
    %v2086 = vrcp.pop %v2029
    %v2087 = vmul.f32 1.0, %v2086
    %v2088 = vrcp.pop %v2030
    %v2089 = vmul.f32 1.0, %v2088
    %v2090 = vrcp.pop %v2031
    %v2091 = vmul.f32 1.0, %v2090
    %v2092 = vrcp.pop %v2032
    %v2093 = vmul.f32 1.0, %v2092
    %v2094 = vrcp.pop %v2033
    %v2095 = vmul.f32 1.0, %v2094
    %v2096 = vrcp.pop %v2034
    %v2097 = vmul.f32 1.0, %v2096
    %v2098 = vrcp.pop %v2035
    %v2099 = vmul.f32 1.0, %v2098
    %v2100 = vld [vmem:[%s12] sm:$0x1]
    %v2102 = vlaneseq
    %v2103 = vshrl.u32 %v2102, 7
    %v2104 = vsub.s32 0, %v2103
    %v2105 = vrot.slane %v2100, %v2104
    %v2107 = vmul.f32 %v2037, %v2105
    %v2108 = vmul.f32 %v2039, %v2105
    %v2109 = vmul.f32 %v2041, %v2105
    %v2110 = vmul.f32 %v2043, %v2105
    %v2111 = vmul.f32 %v2045, %v2105
    %v2112 = vmul.f32 %v2047, %v2105
    %v2113 = vmul.f32 %v2049, %v2105
    %v2114 = vmul.f32 %v2051, %v2105
    %v2115 = vmul.f32 %v2053, %v2105
    %v2116 = vmul.f32 %v2055, %v2105
    %v2117 = vmul.f32 %v2057, %v2105
    %v2118 = vmul.f32 %v2059, %v2105
    %v2119 = vmul.f32 %v2061, %v2105
    %v2120 = vmul.f32 %v2063, %v2105
    %v2121 = vmul.f32 %v2065, %v2105
    %v2122 = vmul.f32 %v2067, %v2105
    %v2123 = vmul.f32 %v2069, %v2105
    %v2124 = vmul.f32 %v2071, %v2105
    %v2125 = vmul.f32 %v2073, %v2105
    %v2126 = vmul.f32 %v2075, %v2105
    %v2127 = vmul.f32 %v2077, %v2105
    %v2128 = vmul.f32 %v2079, %v2105
    %v2129 = vmul.f32 %v2081, %v2105
    %v2130 = vmul.f32 %v2083, %v2105
    %v2131 = vmul.f32 %v2085, %v2105
    %v2132 = vmul.f32 %v2087, %v2105
    %v2133 = vmul.f32 %v2089, %v2105
    %v2134 = vmul.f32 %v2091, %v2105
    %v2135 = vmul.f32 %v2093, %v2105
    %v2136 = vmul.f32 %v2095, %v2105
    %v2137 = vmul.f32 %v2097, %v2105
    %v2138 = vmul.f32 %v2099, %v2105
    %v2139 = vsel %vm121, %v2107, 0.0
    %2140 = vadd.xlane.f32.xlu0 %v2139
    %v2141 = vpop.xlane.xlu0 %2140
    %v2142 = vsel %vm121, %v2108, 0.0
    %2143 = vadd.xlane.f32.xlu0 %v2142
    %v2144 = vpop.xlane.xlu0 %2143
    %v2145 = vsel %vm121, %v2109, 0.0
    %2146 = vadd.xlane.f32.xlu0 %v2145
    %v2147 = vpop.xlane.xlu0 %2146
    %v2148 = vsel %vm121, %v2110, 0.0
    %2149 = vadd.xlane.f32.xlu0 %v2148
    %v2150 = vpop.xlane.xlu0 %2149
    %v2151 = vsel %vm121, %v2111, 0.0
    %2152 = vadd.xlane.f32.xlu0 %v2151
    %v2153 = vpop.xlane.xlu0 %2152
    %v2154 = vsel %vm121, %v2112, 0.0
    %2155 = vadd.xlane.f32.xlu0 %v2154
    %v2156 = vpop.xlane.xlu0 %2155
    %v2157 = vsel %vm121, %v2113, 0.0
    %2158 = vadd.xlane.f32.xlu0 %v2157
    %v2159 = vpop.xlane.xlu0 %2158
    %v2160 = vsel %vm121, %v2114, 0.0
    %2161 = vadd.xlane.f32.xlu0 %v2160
    %v2162 = vpop.xlane.xlu0 %2161
    %v2163 = vsel %vm121, %v2115, 0.0
    %2164 = vadd.xlane.f32.xlu0 %v2163
    %v2165 = vpop.xlane.xlu0 %2164
    %v2166 = vsel %vm121, %v2116, 0.0
    %2167 = vadd.xlane.f32.xlu0 %v2166
    %v2168 = vpop.xlane.xlu0 %2167
    %v2169 = vsel %vm121, %v2117, 0.0
    %2170 = vadd.xlane.f32.xlu0 %v2169
    %v2171 = vpop.xlane.xlu0 %2170
    %v2172 = vsel %vm121, %v2118, 0.0
    %2173 = vadd.xlane.f32.xlu0 %v2172
    %v2174 = vpop.xlane.xlu0 %2173
    %v2175 = vsel %vm121, %v2119, 0.0
    %2176 = vadd.xlane.f32.xlu0 %v2175
    %v2177 = vpop.xlane.xlu0 %2176
    %v2178 = vsel %vm121, %v2120, 0.0
    %2179 = vadd.xlane.f32.xlu0 %v2178
    %v2180 = vpop.xlane.xlu0 %2179
    %v2181 = vsel %vm121, %v2121, 0.0
    %2182 = vadd.xlane.f32.xlu0 %v2181
    %v2183 = vpop.xlane.xlu0 %2182
    %v2184 = vsel %vm121, %v2122, 0.0
    %2185 = vadd.xlane.f32.xlu0 %v2184
    %v2186 = vpop.xlane.xlu0 %2185
    %v2187 = vsel %vm121, %v2123, 0.0
    %2188 = vadd.xlane.f32.xlu0 %v2187
    %v2189 = vpop.xlane.xlu0 %2188
    %v2190 = vsel %vm121, %v2124, 0.0
    %2191 = vadd.xlane.f32.xlu0 %v2190
    %v2192 = vpop.xlane.xlu0 %2191
    %v2193 = vsel %vm121, %v2125, 0.0
    %2194 = vadd.xlane.f32.xlu0 %v2193
    %v2195 = vpop.xlane.xlu0 %2194
    %v2196 = vsel %vm121, %v2126, 0.0
    %2197 = vadd.xlane.f32.xlu0 %v2196
    %v2198 = vpop.xlane.xlu0 %2197
    %v2199 = vsel %vm121, %v2127, 0.0
    %2200 = vadd.xlane.f32.xlu0 %v2199
    %v2201 = vpop.xlane.xlu0 %2200
    %v2202 = vsel %vm121, %v2128, 0.0
    %2203 = vadd.xlane.f32.xlu0 %v2202
    %v2204 = vpop.xlane.xlu0 %2203
    %v2205 = vsel %vm121, %v2129, 0.0
    %2206 = vadd.xlane.f32.xlu0 %v2205
    %v2207 = vpop.xlane.xlu0 %2206
    %v2208 = vsel %vm121, %v2130, 0.0
    %2209 = vadd.xlane.f32.xlu0 %v2208
    %v2210 = vpop.xlane.xlu0 %2209
    %v2211 = vsel %vm121, %v2131, 0.0
    %2212 = vadd.xlane.f32.xlu0 %v2211
    %v2213 = vpop.xlane.xlu0 %2212
    %v2214 = vsel %vm121, %v2132, 0.0
    %2215 = vadd.xlane.f32.xlu0 %v2214
    %v2216 = vpop.xlane.xlu0 %2215
    %v2217 = vsel %vm121, %v2133, 0.0
    %2218 = vadd.xlane.f32.xlu0 %v2217
    %v2219 = vpop.xlane.xlu0 %2218
    %v2220 = vsel %vm121, %v2134, 0.0
    %2221 = vadd.xlane.f32.xlu0 %v2220
    %v2222 = vpop.xlane.xlu0 %2221
    %v2223 = vsel %vm121, %v2135, 0.0
    %2224 = vadd.xlane.f32.xlu0 %v2223
    %v2225 = vpop.xlane.xlu0 %2224
    %v2226 = vsel %vm121, %v2136, 0.0
    %2227 = vadd.xlane.f32.xlu0 %v2226
    %v2228 = vpop.xlane.xlu0 %2227
    %v2229 = vsel %vm121, %v2137, 0.0
    %2230 = vadd.xlane.f32.xlu0 %v2229
    %v2231 = vpop.xlane.xlu0 %2230
    %v2232 = vsel %vm121, %v2138, 0.0
    %2233 = vadd.xlane.f32.xlu0 %v2232
    %v2234 = vpop.xlane.xlu0 %2233
    %s2235 = sld [smem:[#allocation2]]
    %v2236 = vstv %s2235
    %v2237 = vadd.f32 %v2141, %v2236
    %v2238 = vadd.f32 %v2144, %v2236
    %v2239 = vadd.f32 %v2147, %v2236
    %v2240 = vadd.f32 %v2150, %v2236
    %v2241 = vadd.f32 %v2153, %v2236
    %v2242 = vadd.f32 %v2156, %v2236
    %v2243 = vadd.f32 %v2159, %v2236
    %v2244 = vadd.f32 %v2162, %v2236
    %v2245 = vadd.f32 %v2165, %v2236
    %v2246 = vadd.f32 %v2168, %v2236
    %v2247 = vadd.f32 %v2171, %v2236
    %v2248 = vadd.f32 %v2174, %v2236
    %v2249 = vadd.f32 %v2177, %v2236
    %v2250 = vadd.f32 %v2180, %v2236
    %v2251 = vadd.f32 %v2183, %v2236
    %v2252 = vadd.f32 %v2186, %v2236
    %v2253 = vadd.f32 %v2189, %v2236
    %v2254 = vadd.f32 %v2192, %v2236
    %v2255 = vadd.f32 %v2195, %v2236
    %v2256 = vadd.f32 %v2198, %v2236
    %v2257 = vadd.f32 %v2201, %v2236
    %v2258 = vadd.f32 %v2204, %v2236
    %v2259 = vadd.f32 %v2207, %v2236
    %v2260 = vadd.f32 %v2210, %v2236
    %v2261 = vadd.f32 %v2213, %v2236
    %v2262 = vadd.f32 %v2216, %v2236
    %v2263 = vadd.f32 %v2219, %v2236
    %v2264 = vadd.f32 %v2222, %v2236
    %v2265 = vadd.f32 %v2225, %v2236
    %v2266 = vadd.f32 %v2228, %v2236
    %v2267 = vadd.f32 %v2231, %v2236
    %v2268 = vadd.f32 %v2234, %v2236
    %v2269 = vxor.u32 %v2237, 2147483648
    %v2270 = vxor.u32 %v2238, 2147483648
    %v2271 = vxor.u32 %v2239, 2147483648
    %v2272 = vxor.u32 %v2240, 2147483648
    %v2273 = vxor.u32 %v2241, 2147483648
    %v2274 = vxor.u32 %v2242, 2147483648
    %v2275 = vxor.u32 %v2243, 2147483648
    %v2276 = vxor.u32 %v2244, 2147483648
    %v2277 = vxor.u32 %v2245, 2147483648
    %v2278 = vxor.u32 %v2246, 2147483648
    %v2279 = vxor.u32 %v2247, 2147483648
    %v2280 = vxor.u32 %v2248, 2147483648
    %v2281 = vxor.u32 %v2249, 2147483648
    %v2282 = vxor.u32 %v2250, 2147483648
    %v2283 = vxor.u32 %v2251, 2147483648
    %v2284 = vxor.u32 %v2252, 2147483648
    %v2285 = vxor.u32 %v2253, 2147483648
    %v2286 = vxor.u32 %v2254, 2147483648
    %v2287 = vxor.u32 %v2255, 2147483648
    %v2288 = vxor.u32 %v2256, 2147483648
    %v2289 = vxor.u32 %v2257, 2147483648
    %v2290 = vxor.u32 %v2258, 2147483648
    %v2291 = vxor.u32 %v2259, 2147483648
    %v2292 = vxor.u32 %v2260, 2147483648
    %v2293 = vxor.u32 %v2261, 2147483648
    %v2294 = vxor.u32 %v2262, 2147483648
    %v2295 = vxor.u32 %v2263, 2147483648
    %v2296 = vxor.u32 %v2264, 2147483648
    %v2297 = vxor.u32 %v2265, 2147483648
    %v2298 = vxor.u32 %v2266, 2147483648
    %v2299 = vxor.u32 %v2267, 2147483648
    %v2300 = vxor.u32 %v2268, 2147483648
    %v2301 = vmul.f32 %v2269, 1.442695
    %v2302 = vpow.pop %v2301
    %v2303 = vmul.f32 %v2270, 1.442695
    %v2304 = vpow.pop %v2303
    %v2305 = vmul.f32 %v2271, 1.442695
    %v2306 = vpow.pop %v2305
    %v2307 = vmul.f32 %v2272, 1.442695
    %v2308 = vpow.pop %v2307
    %v2309 = vmul.f32 %v2273, 1.442695
    %v2310 = vpow.pop %v2309
    %v2311 = vmul.f32 %v2274, 1.442695
    %v2312 = vpow.pop %v2311
    %v2313 = vmul.f32 %v2275, 1.442695
    %v2314 = vpow.pop %v2313
    %v2315 = vmul.f32 %v2276, 1.442695
    %v2316 = vpow.pop %v2315
    %v2317 = vmul.f32 %v2277, 1.442695
    %v2318 = vpow.pop %v2317
    %v2319 = vmul.f32 %v2278, 1.442695
    %v2320 = vpow.pop %v2319
    %v2321 = vmul.f32 %v2279, 1.442695
    %v2322 = vpow.pop %v2321
    %v2323 = vmul.f32 %v2280, 1.442695
    %v2324 = vpow.pop %v2323
    %v2325 = vmul.f32 %v2281, 1.442695
    %v2326 = vpow.pop %v2325
    %v2327 = vmul.f32 %v2282, 1.442695
    %v2328 = vpow.pop %v2327
    %v2329 = vmul.f32 %v2283, 1.442695
    %v2330 = vpow.pop %v2329
    %v2331 = vmul.f32 %v2284, 1.442695
    %v2332 = vpow.pop %v2331
    %v2333 = vmul.f32 %v2285, 1.442695
    %v2334 = vpow.pop %v2333
    %v2335 = vmul.f32 %v2286, 1.442695
    %v2336 = vpow.pop %v2335
    %v2337 = vmul.f32 %v2287, 1.442695
    %v2338 = vpow.pop %v2337
    %v2339 = vmul.f32 %v2288, 1.442695
    %v2340 = vpow.pop %v2339
    %v2341 = vmul.f32 %v2289, 1.442695
    %v2342 = vpow.pop %v2341
    %v2343 = vmul.f32 %v2290, 1.442695
    %v2344 = vpow.pop %v2343
    %v2345 = vmul.f32 %v2291, 1.442695
    %v2346 = vpow.pop %v2345
    %v2347 = vmul.f32 %v2292, 1.442695
    %v2348 = vpow.pop %v2347
    %v2349 = vmul.f32 %v2293, 1.442695
    %v2350 = vpow.pop %v2349
    %v2351 = vmul.f32 %v2294, 1.442695
    %v2352 = vpow.pop %v2351
    %v2353 = vmul.f32 %v2295, 1.442695
    %v2354 = vpow.pop %v2353
    %v2355 = vmul.f32 %v2296, 1.442695
    %v2356 = vpow.pop %v2355
    %v2357 = vmul.f32 %v2297, 1.442695
    %v2358 = vpow.pop %v2357
    %v2359 = vmul.f32 %v2298, 1.442695
    %v2360 = vpow.pop %v2359
    %v2361 = vmul.f32 %v2299, 1.442695
    %v2362 = vpow.pop %v2361
    %v2363 = vmul.f32 %v2300, 1.442695
    %v2364 = vpow.pop %v2363
    %v2365 = vadd.f32 %v2302, 1.0
    %v2366 = vadd.f32 %v2304, 1.0
    %v2367 = vadd.f32 %v2306, 1.0
    %v2368 = vadd.f32 %v2308, 1.0
    %v2369 = vadd.f32 %v2310, 1.0
    %v2370 = vadd.f32 %v2312, 1.0
    %v2371 = vadd.f32 %v2314, 1.0
    %v2372 = vadd.f32 %v2316, 1.0
    %v2373 = vadd.f32 %v2318, 1.0
    %v2374 = vadd.f32 %v2320, 1.0
    %v2375 = vadd.f32 %v2322, 1.0
    %v2376 = vadd.f32 %v2324, 1.0
    %v2377 = vadd.f32 %v2326, 1.0
    %v2378 = vadd.f32 %v2328, 1.0
    %v2379 = vadd.f32 %v2330, 1.0
    %v2380 = vadd.f32 %v2332, 1.0
    %v2381 = vadd.f32 %v2334, 1.0
    %v2382 = vadd.f32 %v2336, 1.0
    %v2383 = vadd.f32 %v2338, 1.0
    %v2384 = vadd.f32 %v2340, 1.0
    %v2385 = vadd.f32 %v2342, 1.0
    %v2386 = vadd.f32 %v2344, 1.0
    %v2387 = vadd.f32 %v2346, 1.0
    %v2388 = vadd.f32 %v2348, 1.0
    %v2389 = vadd.f32 %v2350, 1.0
    %v2390 = vadd.f32 %v2352, 1.0
    %v2391 = vadd.f32 %v2354, 1.0
    %v2392 = vadd.f32 %v2356, 1.0
    %v2393 = vadd.f32 %v2358, 1.0
    %v2394 = vadd.f32 %v2360, 1.0
    %v2395 = vadd.f32 %v2362, 1.0
    %v2396 = vadd.f32 %v2364, 1.0
    %v2397 = vrcp.pop %v2365
    %v2398 = vmul.f32 1.0, %v2397
    %v2399 = vrcp.pop %v2366
    %v2400 = vmul.f32 1.0, %v2399
    %v2401 = vrcp.pop %v2367
    %v2402 = vmul.f32 1.0, %v2401
    %v2403 = vrcp.pop %v2368
    %v2404 = vmul.f32 1.0, %v2403
    %v2405 = vrcp.pop %v2369
    %v2406 = vmul.f32 1.0, %v2405
    %v2407 = vrcp.pop %v2370
    %v2408 = vmul.f32 1.0, %v2407
    %v2409 = vrcp.pop %v2371
    %v2410 = vmul.f32 1.0, %v2409
    %v2411 = vrcp.pop %v2372
    %v2412 = vmul.f32 1.0, %v2411
    %v2413 = vrcp.pop %v2373
    %v2414 = vmul.f32 1.0, %v2413
    %v2415 = vrcp.pop %v2374
    %v2416 = vmul.f32 1.0, %v2415
    %v2417 = vrcp.pop %v2375
    %v2418 = vmul.f32 1.0, %v2417
    %v2419 = vrcp.pop %v2376
    %v2420 = vmul.f32 1.0, %v2419
    %v2421 = vrcp.pop %v2377
    %v2422 = vmul.f32 1.0, %v2421
    %v2423 = vrcp.pop %v2378
    %v2424 = vmul.f32 1.0, %v2423
    %v2425 = vrcp.pop %v2379
    %v2426 = vmul.f32 1.0, %v2425
    %v2427 = vrcp.pop %v2380
    %v2428 = vmul.f32 1.0, %v2427
    %v2429 = vrcp.pop %v2381
    %v2430 = vmul.f32 1.0, %v2429
    %v2431 = vrcp.pop %v2382
    %v2432 = vmul.f32 1.0, %v2431
    %v2433 = vrcp.pop %v2383
    %v2434 = vmul.f32 1.0, %v2433
    %v2435 = vrcp.pop %v2384
    %v2436 = vmul.f32 1.0, %v2435
    %v2437 = vrcp.pop %v2385
    %v2438 = vmul.f32 1.0, %v2437
    %v2439 = vrcp.pop %v2386
    %v2440 = vmul.f32 1.0, %v2439
    %v2441 = vrcp.pop %v2387
    %v2442 = vmul.f32 1.0, %v2441
    %v2443 = vrcp.pop %v2388
    %v2444 = vmul.f32 1.0, %v2443
    %v2445 = vrcp.pop %v2389
    %v2446 = vmul.f32 1.0, %v2445
    %v2447 = vrcp.pop %v2390
    %v2448 = vmul.f32 1.0, %v2447
    %v2449 = vrcp.pop %v2391
    %v2450 = vmul.f32 1.0, %v2449
    %v2451 = vrcp.pop %v2392
    %v2452 = vmul.f32 1.0, %v2451
    %v2453 = vrcp.pop %v2393
    %v2454 = vmul.f32 1.0, %v2453
    %v2455 = vrcp.pop %v2394
    %v2456 = vmul.f32 1.0, %v2455
    %v2457 = vrcp.pop %v2395
    %v2458 = vmul.f32 1.0, %v2457
    %v2459 = vrcp.pop %v2396
    %v2460 = vmul.f32 1.0, %v2459
    %v2461 = vsel %vm121, %v2037, 0.0
    %v2462 = vsel %vm121, %v2039, 0.0
    %v2463 = vsel %vm121, %v2041, 0.0
    %v2464 = vsel %vm121, %v2043, 0.0
    %v2465 = vsel %vm121, %v2045, 0.0
    %v2466 = vsel %vm121, %v2047, 0.0
    %v2467 = vsel %vm121, %v2049, 0.0
    %v2468 = vsel %vm121, %v2051, 0.0
    %v2469 = vsel %vm121, %v2053, 0.0
    %v2470 = vsel %vm121, %v2055, 0.0
    %v2471 = vsel %vm121, %v2057, 0.0
    %v2472 = vsel %vm121, %v2059, 0.0
    %v2473 = vsel %vm121, %v2061, 0.0
    %v2474 = vsel %vm121, %v2063, 0.0
    %v2475 = vsel %vm121, %v2065, 0.0
    %v2476 = vsel %vm121, %v2067, 0.0
    %v2477 = vsel %vm121, %v2069, 0.0
    %v2478 = vsel %vm121, %v2071, 0.0
    %v2479 = vsel %vm121, %v2073, 0.0
    %v2480 = vsel %vm121, %v2075, 0.0
    %v2481 = vsel %vm121, %v2077, 0.0
    %v2482 = vsel %vm121, %v2079, 0.0
    %v2483 = vsel %vm121, %v2081, 0.0
    %v2484 = vsel %vm121, %v2083, 0.0
    %v2485 = vsel %vm121, %v2085, 0.0
    %v2486 = vsel %vm121, %v2087, 0.0
    %v2487 = vsel %vm121, %v2089, 0.0
    %v2488 = vsel %vm121, %v2091, 0.0
    %v2489 = vsel %vm121, %v2093, 0.0
    %v2490 = vsel %vm121, %v2095, 0.0
    %v2491 = vsel %vm121, %v2097, 0.0
    %v2492 = vsel %vm121, %v2099, 0.0
    %v2493 = vlaneseq
    %v2494 = vand.u32 %v2493, 127
    %vm2495 = vcmp.eq.s32.totalorder %v2494, 66
    %v2496 = vadd.f32 %v765, %v2461
    %v2497 = vadd.f32 %v768, %v2462
    %v2498 = vadd.f32 %v773, %v2463
    %v2499 = vadd.f32 %v776, %v2464
    %v2500 = vadd.f32 %v781, %v2465
    %v2501 = vadd.f32 %v784, %v2466
    %v2502 = vadd.f32 %v789, %v2467
    %v2503 = vadd.f32 %v792, %v2468
    %v2504 = vadd.f32 %v797, %v2469
    %v2505 = vadd.f32 %v800, %v2470
    %v2506 = vadd.f32 %v805, %v2471
    %v2507 = vadd.f32 %v808, %v2472
    %v2508 = vadd.f32 %v813, %v2473
    %v2509 = vadd.f32 %v816, %v2474
    %v2510 = vadd.f32 %v821, %v2475
    %v2511 = vadd.f32 %v824, %v2476
    %v2512 = vadd.f32 %v829, %v2477
    %v2513 = vadd.f32 %v832, %v2478
    %v2514 = vadd.f32 %v837, %v2479
    %v2515 = vadd.f32 %v840, %v2480
    %v2516 = vadd.f32 %v845, %v2481
    %v2517 = vadd.f32 %v848, %v2482
    %v2518 = vadd.f32 %v853, %v2483
    %v2519 = vadd.f32 %v856, %v2484
    %v2520 = vadd.f32 %v861, %v2485
    %v2521 = vadd.f32 %v864, %v2486
    %v2522 = vadd.f32 %v869, %v2487
    %v2523 = vadd.f32 %v872, %v2488
    %v2524 = vadd.f32 %v877, %v2489
    %v2525 = vadd.f32 %v880, %v2490
    %v2526 = vadd.f32 %v885, %v2491
    %v2527 = vadd.f32 %v888, %v2492
    %v2528 = vsel %vm2495, %v2398, %v2496
    %v2529 = vsel %vm2495, %v2400, %v2497
    %v2530 = vsel %vm2495, %v2402, %v2498
    %v2531 = vsel %vm2495, %v2404, %v2499
    %v2532 = vsel %vm2495, %v2406, %v2500
    %v2533 = vsel %vm2495, %v2408, %v2501
    %v2534 = vsel %vm2495, %v2410, %v2502
    %v2535 = vsel %vm2495, %v2412, %v2503
    %v2536 = vsel %vm2495, %v2414, %v2504
    %v2537 = vsel %vm2495, %v2416, %v2505
    %v2538 = vsel %vm2495, %v2418, %v2506
    %v2539 = vsel %vm2495, %v2420, %v2507
    %v2540 = vsel %vm2495, %v2422, %v2508
    %v2541 = vsel %vm2495, %v2424, %v2509
    %v2542 = vsel %vm2495, %v2426, %v2510
    %v2543 = vsel %vm2495, %v2428, %v2511
    %v2544 = vsel %vm2495, %v2430, %v2512
    %v2545 = vsel %vm2495, %v2432, %v2513
    %v2546 = vsel %vm2495, %v2434, %v2514
    %v2547 = vsel %vm2495, %v2436, %v2515
    %v2548 = vsel %vm2495, %v2438, %v2516
    %v2549 = vsel %vm2495, %v2440, %v2517
    %v2550 = vsel %vm2495, %v2442, %v2518
    %v2551 = vsel %vm2495, %v2444, %v2519
    %v2552 = vsel %vm2495, %v2446, %v2520
    %v2553 = vsel %vm2495, %v2448, %v2521
    %v2554 = vsel %vm2495, %v2450, %v2522
    %v2555 = vsel %vm2495, %v2452, %v2523
    %v2556 = vsel %vm2495, %v2454, %v2524
    %v2557 = vsel %vm2495, %v2456, %v2525
    %v2558 = vsel %vm2495, %v2458, %v2526
    %v2559 = vsel %vm2495, %v2460, %v2527
    %2560 = vst [vmem:[#allocation3] sm:$0xff] %v2528
    %2561 = vst [vmem:[#allocation3 + $0x8] sm:$0xff] %v2529
    %2562 = vst [vmem:[#allocation3 + $0x10] sm:$0xff] %v2530
    %2563 = vst [vmem:[#allocation3 + $0x18] sm:$0xff] %v2531
    %2564 = vst [vmem:[#allocation3 + $0x20] sm:$0xff] %v2532
    %2565 = vst [vmem:[#allocation3 + $0x28] sm:$0xff] %v2533
    %2566 = vst [vmem:[#allocation3 + $0x30] sm:$0xff] %v2534
    %2567 = vst [vmem:[#allocation3 + $0x38] sm:$0xff] %v2535
    %2568 = vst [vmem:[#allocation3 + $0x40] sm:$0xff] %v2536
    %2569 = vst [vmem:[#allocation3 + $0x48] sm:$0xff] %v2537
    %2570 = vst [vmem:[#allocation3 + $0x50] sm:$0xff] %v2538
    %2571 = vst [vmem:[#allocation3 + $0x58] sm:$0xff] %v2539
    %2572 = vst [vmem:[#allocation3 + $0x60] sm:$0xff] %v2540
    %2573 = vst [vmem:[#allocation3 + $0x68] sm:$0xff] %v2541
    %2574 = vst [vmem:[#allocation3 + $0x70] sm:$0xff] %v2542
    %2575 = vst [vmem:[#allocation3 + $0x78] sm:$0xff] %v2543
    %2576 = vst [vmem:[#allocation3 + $0x80] sm:$0xff] %v2544
    %2577 = vst [vmem:[#allocation3 + $0x88] sm:$0xff] %v2545
    %2578 = vst [vmem:[#allocation3 + $0x90] sm:$0xff] %v2546
    %2579 = vst [vmem:[#allocation3 + $0x98] sm:$0xff] %v2547
    %2580 = vst [vmem:[#allocation3 + $0xa0] sm:$0xff] %v2548
    %2581 = vst [vmem:[#allocation3 + $0xa8] sm:$0xff] %v2549
    %2582 = vst [vmem:[#allocation3 + $0xb0] sm:$0xff] %v2550
    %2583 = vst [vmem:[#allocation3 + $0xb8] sm:$0xff] %v2551
    %2584 = vst [vmem:[#allocation3 + $0xc0] sm:$0xff] %v2552
    %2585 = vst [vmem:[#allocation3 + $0xc8] sm:$0xff] %v2553
    %2586 = vst [vmem:[#allocation3 + $0xd0] sm:$0xff] %v2554
    %2587 = vst [vmem:[#allocation3 + $0xd8] sm:$0xff] %v2555
    %2588 = vst [vmem:[#allocation3 + $0xe0] sm:$0xff] %v2556
    %2589 = vst [vmem:[#allocation3 + $0xe8] sm:$0xff] %v2557
    %2590 = vst [vmem:[#allocation3 + $0xf0] sm:$0xff] %v2558
    %2591 = vst [vmem:[#allocation3 + $0xf8] sm:$0xff] %v2559
    // Predicated region
    $region58: #{tpu_custom_call.1} parent=1 // pred_check
      _
    $region59: #{tpu_custom_call.1} parent=1 // pred_check_branch
      %2593 = sbr.rel (0) target = $region61
    $region60: #{tpu_custom_call.1} parent=1 // pred_region
      %s2595 = ssub.s32 4096, 4096
      %2596 = vsyncadd [#allocation4], %s2595
      %s2597 = sshll.u32 [#allocation3], 4
      %s2598 = int_to_ptr.vmem [resolvable:$true] %s2597
      %2603 = dma.vmem_to_hbm [thread:$0]  %s2598, 4096, %s14, [#allocation4], 128, 128, 8
    $region61: #{tpu_custom_call.1} parent=1 // pred_fallthru
      _
    // Predicated region
    $region62: #{tpu_custom_call.1} parent=1 // pred_check
      _
    $region63: #{tpu_custom_call.1} parent=1 // pred_check_branch
      %2605 = sbr.rel (0) target = $region65
    $region64: #{tpu_custom_call.1} parent=1 // pred_region
      %2606 = dma.done [#allocation4], 4096
    $region65: #{tpu_custom_call.1} parent=1 // pred_fallthru
      _
    %2607 = vsyncpa [#allocation4], 1

</llo_original>
